<compile_context>
chip_gen: v7x
topology: tpu7x:2x2x1
jax: 0.10.0
libtpu: 0.0.40
codegen_flags: <defaults>
</compile_context>

<pallas_src>
import functools

import jax
import jax.numpy as jnp
from jax.experimental import pallas as pl
from jax.experimental.pallas import tpu as pltpu

# ------------------------- model hyper-params (small) -----------------------
B = 2            # batch
N = 8            # sequence length (tokens)
H = 32           # hidden_size
NUM_HEADS = 4
MLP_RATIO = 4.0
MH = int(H * MLP_RATIO)   # mlp hidden dim = 128
EPS = 1e-6


# ------------------------------ Pallas kernel -------------------------------
def dit_block_kernel(num_heads,
                     x_ref, c_ref,
                     w_ada_ref, b_ada_ref,       # (H, 6H), (1, 6H)
                     w_qkv_ref, b_qkv_ref,       # (H, 3H), (1, 3H)
                     w_proj_ref, b_proj_ref,     # (H, H),  (1, H)
                     w_fc1_ref, b_fc1_ref,       # (H, MH), (1, MH)
                     w_fc2_ref, b_fc2_ref,       # (MH, H), (1, H)
                     o_ref,
                     attn_scratch):              # VMEM (T, H) f32
    bsz, ntok, hid = x_ref.shape
    dh = hid // num_heads
    tkn = bsz * ntok

    x = x_ref[...]           # (B, N, H)
    c = c_ref[...]           # (B, H)

    def layernorm(v):
        # one-pass variance: mean(v*v) - mu*mu (saves a full (B,N,H) VPU pass)
        mu = jnp.mean(v, axis=-1, keepdims=True)
        var = jnp.mean(v * v, axis=-1, keepdims=True) - mu * mu
        return (v - mu) * jax.lax.rsqrt(var + EPS)

    def gelu_tanh(v):
        # matches torch.nn.GELU(approximate='tanh')
        return 0.5 * v * (1.0 + jnp.tanh(0.7978845608028654
                                         * (v + 0.044715 * v * v * v)))

    # ---- adaLN modulation: ONE dense (B,H) @ (H,6H) matmul -----------------
    c_act = c * jax.nn.sigmoid(c)                                    # SiLU
    ada = jnp.dot(c_act, w_ada_ref[...],
                  preferred_element_type=jnp.float32) + b_ada_ref[...]   # (B, 6H)
    shift_msa  = ada[:, 0 * hid:1 * hid][:, None, :]                 # (B, 1, H)
    scale1_msa = (1.0 + ada[:, 1 * hid:2 * hid])[:, None, :]         # hoisted 1+scale
    gate_msa   = ada[:, 2 * hid:3 * hid][:, None, :]
    shift_mlp  = ada[:, 3 * hid:4 * hid][:, None, :]
    scale1_mlp = (1.0 + ada[:, 4 * hid:5 * hid])[:, None, :]
    gate_mlp   = ada[:, 5 * hid:6 * hid][:, None, :]

    # ---- attention branch ---------------------------------------------------
    xm = layernorm(x) * scale1_msa + shift_msa                       # (B, N, H)
    # ONE lane-dense (T,H) @ (H,3H) matmul for q, k and v of every head.
    qkv = jnp.dot(xm.reshape(tkn, hid), w_qkv_ref[...],
                  preferred_element_type=jnp.float32) + b_qkv_ref[...]   # (T, 3H)
    qkv = qkv.reshape(bsz, ntok, 3 * hid)                            # (B, N, 3H)

    scale = dh ** -0.5
    # Per-head attention core (K=dh contractions are inherent to MHA); the
    # head outputs are written at their lane offsets into a (T, H) scratch
    # slab so the output projection is a single K=H contraction.
    for h in range(num_heads):
        q_h = qkv[:, :, 0 * hid + h * dh: 0 * hid + (h + 1) * dh]    # (B, N, dh)
        k_h = qkv[:, :, 1 * hid + h * dh: 1 * hid + (h + 1) * dh]
        v_h = qkv[:, :, 2 * hid + h * dh: 2 * hid + (h + 1) * dh]
        s = jnp.einsum('bqd,bkd->bqk', q_h, k_h,
                       preferred_element_type=jnp.float32) * scale   # (B, N, N)
        s = s - jnp.max(s, axis=-1, keepdims=True)
        p = jnp.exp(s)
        p = p / jnp.sum(p, axis=-1, keepdims=True)                   # exact softmax
        o_h = jnp.einsum('bqk,bkd->bqd', p, v_h,
                         preferred_element_type=jnp.float32)         # (B, N, dh)
        attn_scratch[:, h * dh:(h + 1) * dh] = o_h.reshape(tkn, dh)

    # ONE dense (T,H) @ (H,H) projection — head-sum fused into the contraction.
    attn_out = jnp.dot(attn_scratch[...], w_proj_ref[...],
                       preferred_element_type=jnp.float32) + b_proj_ref[...]  # (T, H)
    x = x + gate_msa * attn_out.reshape(bsz, ntok, hid)              # gated residual

    # ---- MLP branch ----------------------------------------------------------
    xm2 = layernorm(x) * scale1_mlp + shift_mlp                      # (B, N, H)
    h1 = jnp.dot(xm2.reshape(tkn, hid), w_fc1_ref[...],
                 preferred_element_type=jnp.float32) + b_fc1_ref[...]    # (T, MH)
    h1 = gelu_tanh(h1)
    h2 = jnp.dot(h1, w_fc2_ref[...],
                 preferred_element_type=jnp.float32) + b_fc2_ref[...]    # (T, H)

    # Single store of the block output.  (At toy H=32 this is a masked store;
    # at production H, a multiple of 128, it is lane-dense automatically.)
    o_ref[...] = x + gate_mlp * h2.reshape(bsz, ntok, hid)


# ------------------------------ wrapper --------------------------------------
def dit_block(x, c, params, num_heads=NUM_HEADS):
    """x: (B, N, H) f32,  c: (B, H) f32  ->  (B, N, H) f32."""
    b, n, hid = x.shape

    # Weights are passed in their natural (in, out) layout — no host-side
    # relayouts needed; every split inside the kernel is a static lane slice.
    weight_args = (params["w_ada"], params["b_ada"],
                   params["w_qkv"], params["b_qkv"],
                   params["w_proj"], params["b_proj"],
                   params["w_fc1"], params["b_fc1"],
                   params["w_fc2"], params["b_fc2"])

    # Single grid-less invocation: every operand fits in VMEM as a full block,
    # the whole batch is processed in one step (no per-step pipeline overhead).
    return pl.pallas_call(
        functools.partial(dit_block_kernel, num_heads),
        out_shape=jax.ShapeDtypeStruct((b, n, hid), jnp.float32),
        scratch_shapes=[pltpu.VMEM((b * n, hid), jnp.float32)],
    )(x, c, *weight_args)


# --------------------------- pure-JAX reference ------------------------------
def dit_block_ref(x, c, p):
    hid = x.shape[-1]
    nh, dh = NUM_HEADS, hid // NUM_HEADS
    bsz, n, _ = x.shape

    def ln(v):
        mu = jnp.mean(v, -1, keepdims=True)
        var = jnp.mean((v - mu) ** 2, -1, keepdims=True)
        return (v - mu) * jax.lax.rsqrt(var + EPS)

    def gelu_tanh(v):
        return 0.5 * v * (1.0 + jnp.tanh(0.7978845608028654
                                         * (v + 0.044715 * v ** 3)))

    ada = (c * jax.nn.sigmoid(c)) @ p["w_ada"] + p["b_ada"][0]
    sm, scm, gm, sp, scp, gp = jnp.split(ada, 6, axis=-1)

    xm = ln(x) * (1 + scm[:, None, :]) + sm[:, None, :]
    qkv = xm @ p["w_qkv"] + p["b_qkv"][0]
    q, k, v = jnp.split(qkv, 3, axis=-1)
    q = q.reshape(bsz, n, nh, dh).transpose(0, 2, 1, 3)
    k = k.reshape(bsz, n, nh, dh).transpose(0, 2, 1, 3)
    v = v.reshape(bsz, n, nh, dh).transpose(0, 2, 1, 3)
    s = jnp.einsum("bhqd,bhkd->bhqk", q, k) * dh ** -0.5
    a = jnp.einsum("bhqk,bhkd->bhqd", jax.nn.softmax(s, -1), v)
    a = a.transpose(0, 2, 1, 3).reshape(bsz, n, hid)
    a = a @ p["w_proj"] + p["b_proj"][0]
    x = x + gm[:, None, :] * a

    xm2 = ln(x) * (1 + scp[:, None, :]) + sp[:, None, :]
    h1 = gelu_tanh(xm2 @ p["w_fc1"] + p["b_fc1"][0])
    h2 = h1 @ p["w_fc2"] + p["b_fc2"][0]
    return x + gp[:, None, :] * h2


# ----------------------------------- main ------------------------------------
if __name__ == "__main__":
    key = jax.random.PRNGKey(0)
    keys = jax.random.split(key, 14)

    def rnd(k, shape, scale=0.02):
        return (scale * jax.random.normal(k, shape)).astype(jnp.float32)

    # Weights stored in (in, out) layout => y = x @ W + b  (equivalent to
    # PyTorch's y = x @ W_pt.T + b with W_pt of shape (out, in)).
    params = {
        "w_ada":  rnd(keys[0], (H, 6 * H)),   "b_ada":  rnd(keys[1], (1, 6 * H)),
        "w_qkv":  rnd(keys[2], (H, 3 * H)),   "b_qkv":  rnd(keys[3], (1, 3 * H)),
        "w_proj": rnd(keys[4], (H, H)),       "b_proj": rnd(keys[5], (1, H)),
        "w_fc1":  rnd(keys[6], (H, MH)),      "b_fc1":  rnd(keys[7], (1, MH)),
        "w_fc2":  rnd(keys[8], (MH, H)),      "b_fc2":  rnd(keys[9], (1, H)),
    }

    x = jax.random.normal(keys[10], (B, N, H), dtype=jnp.float32)
    c = jax.random.normal(keys[11], (B, H), dtype=jnp.float32)

    out = dit_block(x, c, params)
    out = jax.block_until_ready(out)

    ref = jax.block_until_ready(dit_block_ref(x, c, params))
    assert out.shape == (B, N, H)
    assert jnp.allclose(out, ref, rtol=1e-3, atol=1e-4), (
        f"max err {jnp.max(jnp.abs(out - ref))}")

    print("KERNEL_OK")
</pallas_src>

<mosaic_0001>
module attributes {stable_mosaic.version = 11 : i64} {
  func.func @dit_block_kernel(%arg0: memref<2x8x32xf32, #tpu.memory_space<vmem>>, %arg1: memref<2x32xf32, #tpu.memory_space<vmem>>, %arg2: memref<32x192xf32, #tpu.memory_space<vmem>>, %arg3: memref<1x192xf32, #tpu.memory_space<vmem>>, %arg4: memref<32x96xf32, #tpu.memory_space<vmem>>, %arg5: memref<1x96xf32, #tpu.memory_space<vmem>>, %arg6: memref<32x32xf32, #tpu.memory_space<vmem>>, %arg7: memref<1x32xf32, #tpu.memory_space<vmem>>, %arg8: memref<32x128xf32, #tpu.memory_space<vmem>>, %arg9: memref<1x128xf32, #tpu.memory_space<vmem>>, %arg10: memref<128x32xf32, #tpu.memory_space<vmem>>, %arg11: memref<1x32xf32, #tpu.memory_space<vmem>>, %arg12: memref<2x8x32xf32, #tpu.memory_space<vmem>>, %arg13: memref<16x32xf32, #tpu.memory_space<vmem>>) attributes {dimension_semantics = [], scalar_prefetch = 0 : i64, scratch_operands = 1 : i64, tpu.core_type = #tpu.core_type<tc>} {
    %c0 = arith.constant 0 : index
    %c0_0 = arith.constant 0 : index
    %c0_1 = arith.constant 0 : index
    %0 = vector.load %arg0[%c0, %c0_0, %c0_1] : memref<2x8x32xf32, #tpu.memory_space<vmem>>, vector<2x8x32xf32>
    %c0_2 = arith.constant 0 : index
    %c0_3 = arith.constant 0 : index
    %1 = vector.load %arg1[%c0_2, %c0_3] : memref<2x32xf32, #tpu.memory_space<vmem>>, vector<2x32xf32>
    %2 = arith.negf %1 : vector<2x32xf32>
    %3 = math.exp %2 : vector<2x32xf32>
    %cst = arith.constant 1.000000e+00 : f32
    %4 = vector.broadcast %cst : f32 to vector<2x32xf32>
    %5 = arith.addf %4, %3 : vector<2x32xf32>
    %6 = arith.divf %4, %5 : vector<2x32xf32>
    %7 = arith.mulf %1, %6 : vector<2x32xf32>
    %c0_4 = arith.constant 0 : index
    %c0_5 = arith.constant 0 : index
    %8 = vector.load %arg2[%c0_4, %c0_5] : memref<32x192xf32, #tpu.memory_space<vmem>>, vector<32x192xf32>
    %cst_6 = arith.constant dense<0.000000e+00> : vector<2x192xf32>
    %9 = tpu.matmul %7, %8, %cst_6 {dimension_numbers = #tpu.dot_dimension_numbers<[1], [0], [0], [1], [0, 0, 1, 1], [], []>} : vector<2x32xf32>, vector<32x192xf32>, vector<2x192xf32> -> vector<2x192xf32>
    %c0_7 = arith.constant 0 : index
    %c0_8 = arith.constant 0 : index
    %10 = vector.load %arg3[%c0_7, %c0_8] : memref<1x192xf32, #tpu.memory_space<vmem>>, vector<1x192xf32>
    %11 = vector.broadcast %10 : vector<1x192xf32> to vector<2x192xf32>
    %12 = arith.addf %9, %11 : vector<2x192xf32>
    %13 = vector.extract_strided_slice %12 {offsets = [0, 0], sizes = [2, 32], strides = [1, 1]} : vector<2x192xf32> to vector<2x32xf32>
    %14 = vector.shape_cast %13 : vector<2x32xf32> to vector<2x1x32xf32>
    %15 = vector.extract_strided_slice %12 {offsets = [0, 32], sizes = [2, 32], strides = [1, 1]} : vector<2x192xf32> to vector<2x32xf32>
    %cst_9 = arith.constant 1.000000e+00 : f32
    %16 = vector.broadcast %cst_9 : f32 to vector<2x32xf32>
    %17 = arith.addf %16, %15 : vector<2x32xf32>
    %18 = vector.shape_cast %17 : vector<2x32xf32> to vector<2x1x32xf32>
    %19 = vector.extract_strided_slice %12 {offsets = [0, 64], sizes = [2, 32], strides = [1, 1]} : vector<2x192xf32> to vector<2x32xf32>
    %20 = vector.shape_cast %19 : vector<2x32xf32> to vector<2x1x32xf32>
    %21 = vector.extract_strided_slice %12 {offsets = [0, 96], sizes = [2, 32], strides = [1, 1]} : vector<2x192xf32> to vector<2x32xf32>
    %22 = vector.shape_cast %21 : vector<2x32xf32> to vector<2x1x32xf32>
    %23 = vector.extract_strided_slice %12 {offsets = [0, 128], sizes = [2, 32], strides = [1, 1]} : vector<2x192xf32> to vector<2x32xf32>
    %cst_10 = arith.constant 1.000000e+00 : f32
    %24 = vector.broadcast %cst_10 : f32 to vector<2x32xf32>
    %25 = arith.addf %24, %23 : vector<2x32xf32>
    %26 = vector.shape_cast %25 : vector<2x32xf32> to vector<2x1x32xf32>
    %27 = vector.extract_strided_slice %12 {offsets = [0, 160], sizes = [2, 32], strides = [1, 1]} : vector<2x192xf32> to vector<2x32xf32>
    %28 = vector.shape_cast %27 : vector<2x32xf32> to vector<2x1x32xf32>
    %cst_11 = arith.constant dense<0.000000e+00> : vector<2x8xf32>
    %29 = vector.multi_reduction <add>, %0, %cst_11 [2] : vector<2x8x32xf32> to vector<2x8xf32>
    %30 = vector.shape_cast %29 : vector<2x8xf32> to vector<2x8x1xf32>
    %cst_12 = arith.constant 3.200000e+01 : f32
    %31 = vector.broadcast %cst_12 : f32 to vector<2x8x1xf32>
    %32 = arith.divf %30, %31 : vector<2x8x1xf32>
    %33 = arith.mulf %0, %0 : vector<2x8x32xf32>
    %cst_13 = arith.constant dense<0.000000e+00> : vector<2x8xf32>
    %34 = vector.multi_reduction <add>, %33, %cst_13 [2] : vector<2x8x32xf32> to vector<2x8xf32>
    %35 = vector.shape_cast %34 : vector<2x8xf32> to vector<2x8x1xf32>
    %cst_14 = arith.constant 3.200000e+01 : f32
    %36 = vector.broadcast %cst_14 : f32 to vector<2x8x1xf32>
    %37 = arith.divf %35, %36 : vector<2x8x1xf32>
    %38 = arith.mulf %32, %32 : vector<2x8x1xf32>
    %39 = arith.subf %37, %38 : vector<2x8x1xf32>
    %40 = vector.broadcast %32 : vector<2x8x1xf32> to vector<2x8x32xf32>
    %41 = arith.subf %0, %40 : vector<2x8x32xf32>
    %cst_15 = arith.constant 9.99999997E-7 : f32
    %42 = vector.broadcast %cst_15 : f32 to vector<2x8x1xf32>
    %43 = arith.addf %39, %42 : vector<2x8x1xf32>
    %44 = math.rsqrt %43 : vector<2x8x1xf32>
    %45 = vector.broadcast %44 : vector<2x8x1xf32> to vector<2x8x32xf32>
    %46 = arith.mulf %41, %45 : vector<2x8x32xf32>
    %47 = vector.broadcast %18 : vector<2x1x32xf32> to vector<2x8x32xf32>
    %48 = arith.mulf %46, %47 : vector<2x8x32xf32>
    %49 = vector.broadcast %14 : vector<2x1x32xf32> to vector<2x8x32xf32>
    %50 = arith.addf %48, %49 : vector<2x8x32xf32>
    %51 = vector.shape_cast %50 : vector<2x8x32xf32> to vector<16x32xf32>
    %c0_16 = arith.constant 0 : index
    %c0_17 = arith.constant 0 : index
    %52 = vector.load %arg4[%c0_16, %c0_17] : memref<32x96xf32, #tpu.memory_space<vmem>>, vector<32x96xf32>
    %cst_18 = arith.constant dense<0.000000e+00> : vector<16x96xf32>
    %53 = tpu.matmul %51, %52, %cst_18 {dimension_numbers = #tpu.dot_dimension_numbers<[1], [0], [0], [1], [0, 0, 1, 1], [], []>} : vector<16x32xf32>, vector<32x96xf32>, vector<16x96xf32> -> vector<16x96xf32>
    %c0_19 = arith.constant 0 : index
    %c0_20 = arith.constant 0 : index
    %54 = vector.load %arg5[%c0_19, %c0_20] : memref<1x96xf32, #tpu.memory_space<vmem>>, vector<1x96xf32>
    %55 = vector.broadcast %54 : vector<1x96xf32> to vector<16x96xf32>
    %56 = arith.addf %53, %55 : vector<16x96xf32>
    %57 = vector.shape_cast %56 : vector<16x96xf32> to vector<2x8x96xf32>
    %58 = vector.extract_strided_slice %57 {offsets = [0, 0, 0], sizes = [2, 8, 8], strides = [1, 1, 1]} : vector<2x8x96xf32> to vector<2x8x8xf32>
    %59 = vector.extract_strided_slice %57 {offsets = [0, 0, 32], sizes = [2, 8, 8], strides = [1, 1, 1]} : vector<2x8x96xf32> to vector<2x8x8xf32>
    %60 = vector.extract_strided_slice %57 {offsets = [0, 0, 64], sizes = [2, 8, 8], strides = [1, 1, 1]} : vector<2x8x96xf32> to vector<2x8x8xf32>
    "tpu.trace_start"() <{level = 10 : i32, message = "bqd,bkd->bqk"}> : () -> ()
    %cst_21 = arith.constant dense<0.000000e+00> : vector<2x8x8xf32>
    %61 = tpu.matmul %58, %59, %cst_21 {dimension_numbers = #tpu.dot_dimension_numbers<[2], [2], [1], [1], [0, 0, 0, 1, 1, 1], [0], [0]>} : vector<2x8x8xf32>, vector<2x8x8xf32>, vector<2x8x8xf32> -> vector<2x8x8xf32>
    "tpu.trace_stop"() : () -> ()
    %cst_22 = arith.constant 0.353553385 : f32
    %62 = vector.broadcast %cst_22 : f32 to vector<2x8x8xf32>
    %63 = arith.mulf %61, %62 : vector<2x8x8xf32>
    %cst_23 = arith.constant dense<0xFF800000> : vector<2x8xf32>
    %64 = vector.multi_reduction <maximumf>, %63, %cst_23 [2] : vector<2x8x8xf32> to vector<2x8xf32>
    %65 = vector.shape_cast %64 : vector<2x8xf32> to vector<2x8x1xf32>
    %66 = vector.broadcast %65 : vector<2x8x1xf32> to vector<2x8x8xf32>
    %67 = arith.subf %63, %66 : vector<2x8x8xf32>
    %68 = math.exp %67 : vector<2x8x8xf32>
    %cst_24 = arith.constant dense<0.000000e+00> : vector<2x8xf32>
    %69 = vector.multi_reduction <add>, %68, %cst_24 [2] : vector<2x8x8xf32> to vector<2x8xf32>
    %70 = vector.shape_cast %69 : vector<2x8xf32> to vector<2x8x1xf32>
    %71 = vector.broadcast %70 : vector<2x8x1xf32> to vector<2x8x8xf32>
    %72 = arith.divf %68, %71 : vector<2x8x8xf32>
    "tpu.trace_start"() <{level = 10 : i32, message = "bqk,bkd->bqd"}> : () -> ()
    %cst_25 = arith.constant dense<0.000000e+00> : vector<2x8x8xf32>
    %73 = tpu.matmul %72, %60, %cst_25 {dimension_numbers = #tpu.dot_dimension_numbers<[2], [1], [1], [2], [0, 0, 0, 1, 1, 2], [0], [0]>} : vector<2x8x8xf32>, vector<2x8x8xf32>, vector<2x8x8xf32> -> vector<2x8x8xf32>
    "tpu.trace_stop"() : () -> ()
    %74 = vector.shape_cast %73 : vector<2x8x8xf32> to vector<16x8xf32>
    %c0_26 = arith.constant 0 : index
    %c0_27 = arith.constant 0 : index
    %75 = vector.load %arg13[%c0_26, %c0_27] : memref<16x32xf32, #tpu.memory_space<vmem>>, vector<16x8xf32>
    tpu.vector_store %arg13[%c0_26, %c0_27], %74 {strides = array<i32>} : memref<16x32xf32, #tpu.memory_space<vmem>>, vector<16x8xf32>,
    %76 = vector.extract_strided_slice %57 {offsets = [0, 0, 8], sizes = [2, 8, 8], strides = [1, 1, 1]} : vector<2x8x96xf32> to vector<2x8x8xf32>
    %77 = vector.extract_strided_slice %57 {offsets = [0, 0, 40], sizes = [2, 8, 8], strides = [1, 1, 1]} : vector<2x8x96xf32> to vector<2x8x8xf32>
    %78 = vector.extract_strided_slice %57 {offsets = [0, 0, 72], sizes = [2, 8, 8], strides = [1, 1, 1]} : vector<2x8x96xf32> to vector<2x8x8xf32>
    "tpu.trace_start"() <{level = 10 : i32, message = "bqd,bkd->bqk"}> : () -> ()
    %cst_28 = arith.constant dense<0.000000e+00> : vector<2x8x8xf32>
    %79 = tpu.matmul %76, %77, %cst_28 {dimension_numbers = #tpu.dot_dimension_numbers<[2], [2], [1], [1], [0, 0, 0, 1, 1, 1], [0], [0]>} : vector<2x8x8xf32>, vector<2x8x8xf32>, vector<2x8x8xf32> -> vector<2x8x8xf32>
    "tpu.trace_stop"() : () -> ()
    %cst_29 = arith.constant 0.353553385 : f32
    %80 = vector.broadcast %cst_29 : f32 to vector<2x8x8xf32>
    %81 = arith.mulf %79, %80 : vector<2x8x8xf32>
    %cst_30 = arith.constant dense<0xFF800000> : vector<2x8xf32>
    %82 = vector.multi_reduction <maximumf>, %81, %cst_30 [2] : vector<2x8x8xf32> to vector<2x8xf32>
    %83 = vector.shape_cast %82 : vector<2x8xf32> to vector<2x8x1xf32>
    %84 = vector.broadcast %83 : vector<2x8x1xf32> to vector<2x8x8xf32>
    %85 = arith.subf %81, %84 : vector<2x8x8xf32>
    %86 = math.exp %85 : vector<2x8x8xf32>
    %cst_31 = arith.constant dense<0.000000e+00> : vector<2x8xf32>
    %87 = vector.multi_reduction <add>, %86, %cst_31 [2] : vector<2x8x8xf32> to vector<2x8xf32>
    %88 = vector.shape_cast %87 : vector<2x8xf32> to vector<2x8x1xf32>
    %89 = vector.broadcast %88 : vector<2x8x1xf32> to vector<2x8x8xf32>
    %90 = arith.divf %86, %89 : vector<2x8x8xf32>
    "tpu.trace_start"() <{level = 10 : i32, message = "bqk,bkd->bqd"}> : () -> ()
    %cst_32 = arith.constant dense<0.000000e+00> : vector<2x8x8xf32>
    %91 = tpu.matmul %90, %78, %cst_32 {dimension_numbers = #tpu.dot_dimension_numbers<[2], [1], [1], [2], [0, 0, 0, 1, 1, 2], [0], [0]>} : vector<2x8x8xf32>, vector<2x8x8xf32>, vector<2x8x8xf32> -> vector<2x8x8xf32>
    "tpu.trace_stop"() : () -> ()
    %92 = vector.shape_cast %91 : vector<2x8x8xf32> to vector<16x8xf32>
    %c0_33 = arith.constant 0 : index
    %c8 = arith.constant 8 : index
    %93 = vector.load %arg13[%c0_33, %c8] : memref<16x32xf32, #tpu.memory_space<vmem>>, vector<16x8xf32>
    tpu.vector_store %arg13[%c0_33, %c8], %92 {strides = array<i32>} : memref<16x32xf32, #tpu.memory_space<vmem>>, vector<16x8xf32>,
    %94 = vector.extract_strided_slice %57 {offsets = [0, 0, 16], sizes = [2, 8, 8], strides = [1, 1, 1]} : vector<2x8x96xf32> to vector<2x8x8xf32>
    %95 = vector.extract_strided_slice %57 {offsets = [0, 0, 48], sizes = [2, 8, 8], strides = [1, 1, 1]} : vector<2x8x96xf32> to vector<2x8x8xf32>
    %96 = vector.extract_strided_slice %57 {offsets = [0, 0, 80], sizes = [2, 8, 8], strides = [1, 1, 1]} : vector<2x8x96xf32> to vector<2x8x8xf32>
    "tpu.trace_start"() <{level = 10 : i32, message = "bqd,bkd->bqk"}> : () -> ()
    %cst_34 = arith.constant dense<0.000000e+00> : vector<2x8x8xf32>
    %97 = tpu.matmul %94, %95, %cst_34 {dimension_numbers = #tpu.dot_dimension_numbers<[2], [2], [1], [1], [0, 0, 0, 1, 1, 1], [0], [0]>} : vector<2x8x8xf32>, vector<2x8x8xf32>, vector<2x8x8xf32> -> vector<2x8x8xf32>
    "tpu.trace_stop"() : () -> ()
    %cst_35 = arith.constant 0.353553385 : f32
    %98 = vector.broadcast %cst_35 : f32 to vector<2x8x8xf32>
    %99 = arith.mulf %97, %98 : vector<2x8x8xf32>
    %cst_36 = arith.constant dense<0xFF800000> : vector<2x8xf32>
    %100 = vector.multi_reduction <maximumf>, %99, %cst_36 [2] : vector<2x8x8xf32> to vector<2x8xf32>
    %101 = vector.shape_cast %100 : vector<2x8xf32> to vector<2x8x1xf32>
    %102 = vector.broadcast %101 : vector<2x8x1xf32> to vector<2x8x8xf32>
    %103 = arith.subf %99, %102 : vector<2x8x8xf32>
    %104 = math.exp %103 : vector<2x8x8xf32>
    %cst_37 = arith.constant dense<0.000000e+00> : vector<2x8xf32>
    %105 = vector.multi_reduction <add>, %104, %cst_37 [2] : vector<2x8x8xf32> to vector<2x8xf32>
    %106 = vector.shape_cast %105 : vector<2x8xf32> to vector<2x8x1xf32>
    %107 = vector.broadcast %106 : vector<2x8x1xf32> to vector<2x8x8xf32>
    %108 = arith.divf %104, %107 : vector<2x8x8xf32>
    "tpu.trace_start"() <{level = 10 : i32, message = "bqk,bkd->bqd"}> : () -> ()
    %cst_38 = arith.constant dense<0.000000e+00> : vector<2x8x8xf32>
    %109 = tpu.matmul %108, %96, %cst_38 {dimension_numbers = #tpu.dot_dimension_numbers<[2], [1], [1], [2], [0, 0, 0, 1, 1, 2], [0], [0]>} : vector<2x8x8xf32>, vector<2x8x8xf32>, vector<2x8x8xf32> -> vector<2x8x8xf32>
    "tpu.trace_stop"() : () -> ()
    %110 = vector.shape_cast %109 : vector<2x8x8xf32> to vector<16x8xf32>
    %c0_39 = arith.constant 0 : index
    %c16 = arith.constant 16 : index
    %111 = vector.load %arg13[%c0_39, %c16] : memref<16x32xf32, #tpu.memory_space<vmem>>, vector<16x8xf32>
    tpu.vector_store %arg13[%c0_39, %c16], %110 {strides = array<i32>} : memref<16x32xf32, #tpu.memory_space<vmem>>, vector<16x8xf32>,
    %112 = vector.extract_strided_slice %57 {offsets = [0, 0, 24], sizes = [2, 8, 8], strides = [1, 1, 1]} : vector<2x8x96xf32> to vector<2x8x8xf32>
    %113 = vector.extract_strided_slice %57 {offsets = [0, 0, 56], sizes = [2, 8, 8], strides = [1, 1, 1]} : vector<2x8x96xf32> to vector<2x8x8xf32>
    %114 = vector.extract_strided_slice %57 {offsets = [0, 0, 88], sizes = [2, 8, 8], strides = [1, 1, 1]} : vector<2x8x96xf32> to vector<2x8x8xf32>
    "tpu.trace_start"() <{level = 10 : i32, message = "bqd,bkd->bqk"}> : () -> ()
    %cst_40 = arith.constant dense<0.000000e+00> : vector<2x8x8xf32>
    %115 = tpu.matmul %112, %113, %cst_40 {dimension_numbers = #tpu.dot_dimension_numbers<[2], [2], [1], [1], [0, 0, 0, 1, 1, 1], [0], [0]>} : vector<2x8x8xf32>, vector<2x8x8xf32>, vector<2x8x8xf32> -> vector<2x8x8xf32>
    "tpu.trace_stop"() : () -> ()
    %cst_41 = arith.constant 0.353553385 : f32
    %116 = vector.broadcast %cst_41 : f32 to vector<2x8x8xf32>
    %117 = arith.mulf %115, %116 : vector<2x8x8xf32>
    %cst_42 = arith.constant dense<0xFF800000> : vector<2x8xf32>
    %118 = vector.multi_reduction <maximumf>, %117, %cst_42 [2] : vector<2x8x8xf32> to vector<2x8xf32>
    %119 = vector.shape_cast %118 : vector<2x8xf32> to vector<2x8x1xf32>
    %120 = vector.broadcast %119 : vector<2x8x1xf32> to vector<2x8x8xf32>
    %121 = arith.subf %117, %120 : vector<2x8x8xf32>
    %122 = math.exp %121 : vector<2x8x8xf32>
    %cst_43 = arith.constant dense<0.000000e+00> : vector<2x8xf32>
    %123 = vector.multi_reduction <add>, %122, %cst_43 [2] : vector<2x8x8xf32> to vector<2x8xf32>
    %124 = vector.shape_cast %123 : vector<2x8xf32> to vector<2x8x1xf32>
    %125 = vector.broadcast %124 : vector<2x8x1xf32> to vector<2x8x8xf32>
    %126 = arith.divf %122, %125 : vector<2x8x8xf32>
    "tpu.trace_start"() <{level = 10 : i32, message = "bqk,bkd->bqd"}> : () -> ()
    %cst_44 = arith.constant dense<0.000000e+00> : vector<2x8x8xf32>
    %127 = tpu.matmul %126, %114, %cst_44 {dimension_numbers = #tpu.dot_dimension_numbers<[2], [1], [1], [2], [0, 0, 0, 1, 1, 2], [0], [0]>} : vector<2x8x8xf32>, vector<2x8x8xf32>, vector<2x8x8xf32> -> vector<2x8x8xf32>
    "tpu.trace_stop"() : () -> ()
    %128 = vector.shape_cast %127 : vector<2x8x8xf32> to vector<16x8xf32>
    %c0_45 = arith.constant 0 : index
    %c24 = arith.constant 24 : index
    %129 = vector.load %arg13[%c0_45, %c24] : memref<16x32xf32, #tpu.memory_space<vmem>>, vector<16x8xf32>
    tpu.vector_store %arg13[%c0_45, %c24], %128 {strides = array<i32>} : memref<16x32xf32, #tpu.memory_space<vmem>>, vector<16x8xf32>,
    %c0_46 = arith.constant 0 : index
    %c0_47 = arith.constant 0 : index
    %130 = vector.load %arg13[%c0_46, %c0_47] : memref<16x32xf32, #tpu.memory_space<vmem>>, vector<16x32xf32>
    %c0_48 = arith.constant 0 : index
    %c0_49 = arith.constant 0 : index
    %131 = vector.load %arg6[%c0_48, %c0_49] : memref<32x32xf32, #tpu.memory_space<vmem>>, vector<32x32xf32>
    %cst_50 = arith.constant dense<0.000000e+00> : vector<16x32xf32>
    %132 = tpu.matmul %130, %131, %cst_50 {dimension_numbers = #tpu.dot_dimension_numbers<[1], [0], [0], [1], [0, 0, 1, 1], [], []>} : vector<16x32xf32>, vector<32x32xf32>, vector<16x32xf32> -> vector<16x32xf32>
    %c0_51 = arith.constant 0 : index
    %c0_52 = arith.constant 0 : index
    %133 = vector.load %arg7[%c0_51, %c0_52] : memref<1x32xf32, #tpu.memory_space<vmem>>, vector<1x32xf32>
    %134 = vector.broadcast %133 : vector<1x32xf32> to vector<16x32xf32>
    %135 = arith.addf %132, %134 : vector<16x32xf32>
    %136 = vector.shape_cast %135 : vector<16x32xf32> to vector<2x8x32xf32>
    %137 = vector.broadcast %20 : vector<2x1x32xf32> to vector<2x8x32xf32>
    %138 = arith.mulf %137, %136 : vector<2x8x32xf32>
    %139 = arith.addf %0, %138 : vector<2x8x32xf32>
    %cst_53 = arith.constant dense<0.000000e+00> : vector<2x8xf32>
    %140 = vector.multi_reduction <add>, %139, %cst_53 [2] : vector<2x8x32xf32> to vector<2x8xf32>
    %141 = vector.shape_cast %140 : vector<2x8xf32> to vector<2x8x1xf32>
    %cst_54 = arith.constant 3.200000e+01 : f32
    %142 = vector.broadcast %cst_54 : f32 to vector<2x8x1xf32>
    %143 = arith.divf %141, %142 : vector<2x8x1xf32>
    %144 = arith.mulf %139, %139 : vector<2x8x32xf32>
    %cst_55 = arith.constant dense<0.000000e+00> : vector<2x8xf32>
    %145 = vector.multi_reduction <add>, %144, %cst_55 [2] : vector<2x8x32xf32> to vector<2x8xf32>
    %146 = vector.shape_cast %145 : vector<2x8xf32> to vector<2x8x1xf32>
    %cst_56 = arith.constant 3.200000e+01 : f32
    %147 = vector.broadcast %cst_56 : f32 to vector<2x8x1xf32>
    %148 = arith.divf %146, %147 : vector<2x8x1xf32>
    %149 = arith.mulf %143, %143 : vector<2x8x1xf32>
    %150 = arith.subf %148, %149 : vector<2x8x1xf32>
    %151 = vector.broadcast %143 : vector<2x8x1xf32> to vector<2x8x32xf32>
    %152 = arith.subf %139, %151 : vector<2x8x32xf32>
    %cst_57 = arith.constant 9.99999997E-7 : f32
    %153 = vector.broadcast %cst_57 : f32 to vector<2x8x1xf32>
    %154 = arith.addf %150, %153 : vector<2x8x1xf32>
    %155 = math.rsqrt %154 : vector<2x8x1xf32>
    %156 = vector.broadcast %155 : vector<2x8x1xf32> to vector<2x8x32xf32>
    %157 = arith.mulf %152, %156 : vector<2x8x32xf32>
    %158 = vector.broadcast %26 : vector<2x1x32xf32> to vector<2x8x32xf32>
    %159 = arith.mulf %157, %158 : vector<2x8x32xf32>
    %160 = vector.broadcast %22 : vector<2x1x32xf32> to vector<2x8x32xf32>
    %161 = arith.addf %159, %160 : vector<2x8x32xf32>
    %162 = vector.shape_cast %161 : vector<2x8x32xf32> to vector<16x32xf32>
    %c0_58 = arith.constant 0 : index
    %c0_59 = arith.constant 0 : index
    %163 = vector.load %arg8[%c0_58, %c0_59] : memref<32x128xf32, #tpu.memory_space<vmem>>, vector<32x128xf32>
    %cst_60 = arith.constant dense<0.000000e+00> : vector<16x128xf32>
    %164 = tpu.matmul %162, %163, %cst_60 {dimension_numbers = #tpu.dot_dimension_numbers<[1], [0], [0], [1], [0, 0, 1, 1], [], []>} : vector<16x32xf32>, vector<32x128xf32>, vector<16x128xf32> -> vector<16x128xf32>
    %c0_61 = arith.constant 0 : index
    %c0_62 = arith.constant 0 : index
    %165 = vector.load %arg9[%c0_61, %c0_62] : memref<1x128xf32, #tpu.memory_space<vmem>>, vector<1x128xf32>
    %166 = vector.broadcast %165 : vector<1x128xf32> to vector<16x128xf32>
    %167 = arith.addf %164, %166 : vector<16x128xf32>
    %cst_63 = arith.constant 5.000000e-01 : f32
    %168 = vector.broadcast %cst_63 : f32 to vector<16x128xf32>
    %169 = arith.mulf %168, %167 : vector<16x128xf32>
    %cst_64 = arith.constant 4.471500e-02 : f32
    %170 = vector.broadcast %cst_64 : f32 to vector<16x128xf32>
    %171 = arith.mulf %170, %167 : vector<16x128xf32>
    %172 = arith.mulf %171, %167 : vector<16x128xf32>
    %173 = arith.mulf %172, %167 : vector<16x128xf32>
    %174 = arith.addf %167, %173 : vector<16x128xf32>
    %cst_65 = arith.constant 0.797884583 : f32
    %175 = vector.broadcast %cst_65 : f32 to vector<16x128xf32>
    %176 = arith.mulf %175, %174 : vector<16x128xf32>
    %177 = math.tanh %176 : vector<16x128xf32>
    %cst_66 = arith.constant 1.000000e+00 : f32
    %178 = vector.broadcast %cst_66 : f32 to vector<16x128xf32>
    %179 = arith.addf %178, %177 : vector<16x128xf32>
    %180 = arith.mulf %169, %179 : vector<16x128xf32>
    %c0_67 = arith.constant 0 : index
    %c0_68 = arith.constant 0 : index
    %181 = vector.load %arg10[%c0_67, %c0_68] : memref<128x32xf32, #tpu.memory_space<vmem>>, vector<128x32xf32>
    %cst_69 = arith.constant dense<0.000000e+00> : vector<16x32xf32>
    %182 = tpu.matmul %180, %181, %cst_69 {dimension_numbers = #tpu.dot_dimension_numbers<[1], [0], [0], [1], [0, 0, 1, 1], [], []>} : vector<16x128xf32>, vector<128x32xf32>, vector<16x32xf32> -> vector<16x32xf32>
    %c0_70 = arith.constant 0 : index
    %c0_71 = arith.constant 0 : index
    %183 = vector.load %arg11[%c0_70, %c0_71] : memref<1x32xf32, #tpu.memory_space<vmem>>, vector<1x32xf32>
    %184 = vector.broadcast %183 : vector<1x32xf32> to vector<16x32xf32>
    %185 = arith.addf %182, %184 : vector<16x32xf32>
    %186 = vector.shape_cast %185 : vector<16x32xf32> to vector<2x8x32xf32>
    %187 = vector.broadcast %28 : vector<2x1x32xf32> to vector<2x8x32xf32>
    %188 = arith.mulf %187, %186 : vector<2x8x32xf32>
    %189 = arith.addf %139, %188 : vector<2x8x32xf32>
    %c0_72 = arith.constant 0 : index
    %c0_73 = arith.constant 0 : index
    %c0_74 = arith.constant 0 : index
    %190 = vector.load %arg12[%c0_72, %c0_73, %c0_74] : memref<2x8x32xf32, #tpu.memory_space<vmem>>, vector<2x8x32xf32>
    tpu.vector_store %arg12[%c0_72, %c0_73, %c0_74], %189 {strides = array<i32>} : memref<2x8x32xf32, #tpu.memory_space<vmem>>, vector<2x8x32xf32>,
    return
  }
}

</mosaic_0001>

<llo_original>
// kernel: tpu_custom_call.1
$region0: #{tpu_custom_call.1}
  #allocation0 [shape = 'u32[]', space=smem, size = 0x4, offset = 0x4, fixed_abs, tag = 'smem constant byte address 0x4 - core index']
  #allocation1 [shape = 'u32[144,128]{1,0:T(1,128)}', space=vmem, size = 0x12000, scoped, tag = 'internal scratch']
  #allocation2 [shape = 'f32[16,32]{1,0:T(8,128)}', space=vmem, size = 0x2000, scoped, tag = 'scratch operand']
  %s0 = inlined_call_operand.hbm [shape: f32[2,8,32], index: 0, kind: input, shape index: {}]
  %s1 = inlined_call_operand.vmem [shape: f32[2,32], index: 1, kind: input, shape index: {}]
  %s2 = inlined_call_operand.vmem [shape: f32[32,192], index: 2, kind: input, shape index: {}]
  %s3 = inlined_call_operand.vmem [shape: f32[1,192], index: 3, kind: input, shape index: {}]
  %s4 = inlined_call_operand.vmem [shape: f32[32,96], index: 4, kind: input, shape index: {}]
  %s5 = inlined_call_operand.vmem [shape: f32[1,96], index: 5, kind: input, shape index: {}]
  %s6 = inlined_call_operand.vmem [shape: f32[32,32], index: 6, kind: input, shape index: {}]
  %s7 = inlined_call_operand.hbm [shape: f32[1,32], index: 7, kind: input, shape index: {}]
  %s8 = inlined_call_operand.vmem [shape: f32[32,128], index: 8, kind: input, shape index: {}]
  %s9 = inlined_call_operand.hbm [shape: f32[1,128], index: 9, kind: input, shape index: {}]
  %s10 = inlined_call_operand.vmem [shape: f32[128,32], index: 10, kind: input, shape index: {}]
  %s11 = inlined_call_operand.vmem [shape: f32[1,32], index: 11, kind: input, shape index: {}]
  %s12 = inlined_call_operand.hbm [shape: f32[2,8,32], index: 12, kind: output, shape index: {}]
  %s13 = sld [smem:[#allocation0]]
  $region70: #{tpu_custom_call.1} parent=0
    _
  %s15 = ssub.s32 1, %s13
  %s16 = scalar_select 0, %s15, %s13
  $region1: #{tpu_custom_call.1} parent=0
    #allocation3 [shape = 'u8[8192]{0}', space=vmem, size = 0x2000, scoped, tag = 'input window, operand 0, single buffered']
    #allocation4 [shape = 's32[1]{0}', space=sflag, size = 0x4, scoped, tag = 'scoped memory for tpu_custom_call.1']
    #allocation5 [shape = 's32[1]{0}', space=sflag, size = 0x4, scoped, tag = 'scoped memory for tpu_custom_call.1']
    #allocation6 [shape = 'u8[512]{0}', space=vmem, size = 0x400, scoped, tag = 'input window, operand 7, single buffered']
    #allocation7 [shape = 's32[1]{0}', space=sflag, size = 0x4, scoped, tag = 'scoped memory for tpu_custom_call.1']
    #allocation8 [shape = 'u8[512]{0}', space=vmem, size = 0x400, scoped, tag = 'input window, operand 9, single buffered']
    #allocation9 [shape = 'u8[8192]{0}', space=vmem, size = 0x2000, scoped, tag = 'output window, operand 0, single buffered']
    %17 = vsyncpa [#allocation4], 0
    %18 = vsyncpa [#allocation7], 0
    %19 = vsyncpa [#allocation5], 0
    // Predicated region
    $region2: #{tpu_custom_call.1} parent=1 // pred_check
      _
    $region3: #{tpu_custom_call.1} parent=1 // pred_check_branch
      %21 = sbr.rel (0) target = $region5
    $region4: #{tpu_custom_call.1} parent=1 // pred_region
      %s23 = ssub.s32 256, 256
      %24 = vsyncadd [#allocation4], %s23
      %s25 = sshll.u32 [#allocation3], 4
      %s26 = int_to_ptr.vmem [resolvable:$true] %s25
      %31 = dma.hbm_to_vmem [thread:$0]  %s0, 256, %s26, [#allocation4], 128, 128, 8
    $region5: #{tpu_custom_call.1} parent=1 // pred_fallthru
      _
    // Predicated region
    $region6: #{tpu_custom_call.1} parent=1 // pred_check
      _
    $region7: #{tpu_custom_call.1} parent=1 // pred_check_branch
      %33 = sbr.rel (0) target = $region9
    $region8: #{tpu_custom_call.1} parent=1 // pred_region
      _
    $region9: #{tpu_custom_call.1} parent=1 // pred_fallthru
      _
    // Predicated region
    $region10: #{tpu_custom_call.1} parent=1 // pred_check
      _
    $region11: #{tpu_custom_call.1} parent=1 // pred_check_branch
      %35 = sbr.rel (0) target = $region13
    $region12: #{tpu_custom_call.1} parent=1 // pred_region
      _
    $region13: #{tpu_custom_call.1} parent=1 // pred_fallthru
      _
    // Predicated region
    $region14: #{tpu_custom_call.1} parent=1 // pred_check
      _
    $region15: #{tpu_custom_call.1} parent=1 // pred_check_branch
      %37 = sbr.rel (0) target = $region17
    $region16: #{tpu_custom_call.1} parent=1 // pred_region
      _
    $region17: #{tpu_custom_call.1} parent=1 // pred_fallthru
      _
    // Predicated region
    $region18: #{tpu_custom_call.1} parent=1 // pred_check
      _
    $region19: #{tpu_custom_call.1} parent=1 // pred_check_branch
      %39 = sbr.rel (0) target = $region21
    $region20: #{tpu_custom_call.1} parent=1 // pred_region
      _
    $region21: #{tpu_custom_call.1} parent=1 // pred_fallthru
      _
    // Predicated region
    $region22: #{tpu_custom_call.1} parent=1 // pred_check
      _
    $region23: #{tpu_custom_call.1} parent=1 // pred_check_branch
      %41 = sbr.rel (0) target = $region25
    $region24: #{tpu_custom_call.1} parent=1 // pred_region
      _
    $region25: #{tpu_custom_call.1} parent=1 // pred_fallthru
      _
    // Predicated region
    $region26: #{tpu_custom_call.1} parent=1 // pred_check
      _
    $region27: #{tpu_custom_call.1} parent=1 // pred_check_branch
      %43 = sbr.rel (0) target = $region29
    $region28: #{tpu_custom_call.1} parent=1 // pred_region
      _
    $region29: #{tpu_custom_call.1} parent=1 // pred_fallthru
      _
    // Predicated region
    $region30: #{tpu_custom_call.1} parent=1 // pred_check
      _
    $region31: #{tpu_custom_call.1} parent=1 // pred_check_branch
      %45 = sbr.rel (0) target = $region33
    $region32: #{tpu_custom_call.1} parent=1 // pred_region
      %s47 = ssub.s32 16, 16
      %48 = vsyncadd [#allocation7], %s47
      %s50 = sshll.u32 [#allocation6], 4
      %s51 = int_to_ptr.vmem [resolvable:$true] %s50
      %53 = dma.hbm_to_vmem [thread:$0]  %s7, 16, %s51, [#allocation7]
    $region33: #{tpu_custom_call.1} parent=1 // pred_fallthru
      _
    // Predicated region
    $region34: #{tpu_custom_call.1} parent=1 // pred_check
      _
    $region35: #{tpu_custom_call.1} parent=1 // pred_check_branch
      %55 = sbr.rel (0) target = $region37
    $region36: #{tpu_custom_call.1} parent=1 // pred_region
      _
    $region37: #{tpu_custom_call.1} parent=1 // pred_fallthru
      _
    // Predicated region
    $region38: #{tpu_custom_call.1} parent=1 // pred_check
      _
    $region39: #{tpu_custom_call.1} parent=1 // pred_check_branch
      %57 = sbr.rel (0) target = $region41
    $region40: #{tpu_custom_call.1} parent=1 // pred_region
      %s59 = ssub.s32 16, 16
      %60 = vsyncadd [#allocation7], %s59
      %s62 = sshll.u32 [#allocation8], 4
      %s63 = int_to_ptr.vmem [resolvable:$true] %s62
      %65 = dma.hbm_to_vmem [thread:$0]  %s9, 16, %s63, [#allocation7]
    $region41: #{tpu_custom_call.1} parent=1 // pred_fallthru
      _
    // Predicated region
    $region42: #{tpu_custom_call.1} parent=1 // pred_check
      _
    $region43: #{tpu_custom_call.1} parent=1 // pred_check_branch
      %67 = sbr.rel (0) target = $region45
    $region44: #{tpu_custom_call.1} parent=1 // pred_region
      _
    $region45: #{tpu_custom_call.1} parent=1 // pred_fallthru
      _
    // Predicated region
    $region46: #{tpu_custom_call.1} parent=1 // pred_check
      _
    $region47: #{tpu_custom_call.1} parent=1 // pred_check_branch
      %69 = sbr.rel (0) target = $region49
    $region48: #{tpu_custom_call.1} parent=1 // pred_region
      _
    $region49: #{tpu_custom_call.1} parent=1 // pred_fallthru
      _
    // Predicated region
    $region50: #{tpu_custom_call.1} parent=1 // pred_check
      _
    $region51: #{tpu_custom_call.1} parent=1 // pred_check_branch
      %71 = sbr.rel (0) target = $region53
    $region52: #{tpu_custom_call.1} parent=1 // pred_region
      %72 = dma.done [#allocation4], 256
    $region53: #{tpu_custom_call.1} parent=1 // pred_fallthru
      _
    // Predicated region
    $region54: #{tpu_custom_call.1} parent=1 // pred_check
      _
    $region55: #{tpu_custom_call.1} parent=1 // pred_check_branch
      %74 = sbr.rel (0) target = $region57
    $region56: #{tpu_custom_call.1} parent=1 // pred_region
      %75 = dma.done [#allocation7], 16
    $region57: #{tpu_custom_call.1} parent=1 // pred_fallthru
      _
    // Predicated region
    $region58: #{tpu_custom_call.1} parent=1 // pred_check
      _
    $region59: #{tpu_custom_call.1} parent=1 // pred_check_branch
      %77 = sbr.rel (0) target = $region61
    $region60: #{tpu_custom_call.1} parent=1 // pred_region
      %78 = dma.done [#allocation7], 16
    $region61: #{tpu_custom_call.1} parent=1 // pred_fallthru
      _
    %v79 = vld [vmem:[#allocation3] sm:$0xff]
    %v80 = vld [vmem:[#allocation3 + $0x8] sm:$0xff]
    %v81 = vld [vmem:[%s1] sm:$0x3]
    %v82 = vxor.u32 %v81, 2147483648
    %v83 = vmul.f32 %v82, 1.442695
    %v84 = vpow.pop %v83
    %v85 = vadd.f32 %v84, 1.0
    %v86 = vrcp.pop %v85
    %v87 = vmul.f32 1.0, %v86
    %v88 = vmul.f32 %v81, %v87
    %v89 = vld [vmem:[%s2] sm:$0xff]
    %v90 = vld [vmem:[%s2 + $0x8] sm:$0xff]
    %v91 = vld [vmem:[%s2 + $0x10] sm:$0xff]
    %v92 = vld [vmem:[%s2 + $0x18] sm:$0xff]
    %v93 = vld [vmem:[%s2 + $0x20] sm:$0xff]
    %v94 = vld [vmem:[%s2 + $0x28] sm:$0xff]
    %v95 = vld [vmem:[%s2 + $0x30] sm:$0xff]
    %v96 = vld [vmem:[%s2 + $0x38] sm:$0xff]
    %v97 = vld [vmem:[%s3] sm:$0x3]
    %v99 = vlaneseq
    %v100 = vshrl.u32 %v99, 7
    %v101 = vsub.s32 0, %v100
    %v102 = vrot.slane %v97, %v101
    %v103 = vlaneseq
    %v104 = vshrl.u32 %v103, 7
    %v105 = vsub.s32 1, %v104
    %v106 = vrot.slane %v97, %v105
    %vm109 = vcmask 261120
    %v111 = vsel %vm109, %v88, 0
    %113 = vmatprep.subr.mxu0 %v90
    %114 = vmatpush1.msra.mxu0 %v89
    %115 = vmatprep.subr.mxu0 %v92
    %116 = vmatpush1.msra.mxu0 %v91
    %117 = vmatprep.subr.mxu0 %v94
    %118 = vmatpush1.msra.mxu0 %v93
    %119 = vmatprep.subr.mxu0 %v96
    %120 = vmatpush1.msra.mxu0 %v95
    %121 = vmatprep.subr.mxu0 0.0
    %122 = vmatpush1.msra.mxu0 0.0
    %123 = vmatprep.subr.mxu0 0.0
    %124 = vmatpush1.msra.mxu0 0.0
    %125 = vmatprep.subr.mxu0 0.0
    %126 = vmatpush1.msra.mxu0 0.0
    %127 = vmatprep.subr.mxu0 0.0
    %128 = vmatpush1.msra.mxu0 0.0
    %129 = vmatprep.subr.mxu0 0.0
    %130 = vmatpush1.msra.mxu0 0.0
    %131 = vmatprep.subr.mxu0 0.0
    %132 = vmatpush1.msra.mxu0 0.0
    %133 = vmatprep.subr.mxu0 0.0
    %134 = vmatpush1.msra.mxu0 0.0
    %135 = vmatprep.subr.mxu0 0.0
    %136 = vmatpush1.msra.mxu0 0.0
    %137 = vmatprep.subr.mxu0 0.0
    %138 = vmatpush1.msra.mxu0 0.0
    %139 = vmatprep.subr.mxu0 0.0
    %140 = vmatpush1.msra.mxu0 0.0
    %141 = vmatprep.subr.mxu0 0.0
    %142 = vmatpush1.msra.mxu0 0.0
    %143 = vmatprep.subr.mxu0 0.0
    %144 = vmatpush1.msra.mxu0 0.0
    %145 = vmatprep.subr.mxu0 0.0
    %146 = vmatpush1.msra.mxu0 0.0
    %147 = vmatprep.subr.mxu0 0.0
    %148 = vmatpush1.msra.mxu0 0.0
    %149 = vmatprep.subr.mxu0 0.0
    %150 = vmatpush1.msra.mxu0 0.0
    %151 = vmatprep.subr.mxu0 0.0
    %152 = vmatpush1.msra.mxu0 0.0
    %153 = vmatprep.subr.mxu0 0.0
    %154 = vmatpush1.msra.mxu0 0.0
    %155 = vmatprep.subr.mxu0 0.0
    %156 = vmatpush1.msra.mxu0 0.0
    %157 = vmatprep.subr.mxu0 0.0
    %158 = vmatpush1.msra.mxu0 0.0
    %159 = vmatprep.subr.mxu0 0.0
    %160 = vmatpush1.msra.mxu0 0.0
    %161 = vmatprep.subr.mxu0 0.0
    %162 = vmatpush1.msra.mxu0 0.0
    %163 = vmatprep.subr.mxu0 0.0
    %164 = vmatpush1.msra.mxu0 0.0
    %165 = vmatprep.subr.mxu0 0.0
    %166 = vmatpush1.msra.mxu0 0.0
    %167 = vmatprep.subr.mxu0 0.0
    %168 = vmatpush1.msra.mxu0 0.0
    %169 = vmatprep.subr.mxu0 0.0
    %170 = vmatpush1.msra.mxu0 0.0
    %171 = vmatprep.subr.mxu0 0.0
    %172 = vmatpush1.msra.mxu0 0.0
    %173 = vmatprep.subr.mxu0 0.0
    %174 = vmatpush1.msra.mxu0 0.0
    %175 = vmatprep.subr.mxu0 0.0
    %176 = vmatpush1.msra.mxu0 0.0
    %177 = vmatprep.mubr.f32.mxu0 0.0
    %178 = vmatmul.mubr.f32.gmra.mrb[0].mxu0 %v111
    %v179 = vpop.f32.mrb[0].mxu0
    %v180 = vadd.f32 %v102, %v179
    %v181 = vpop.f32.mrb[0].mxu0
    %v182 = vadd.f32 %v106, %v181
    %183 = vdwg.mxu0
    %v186 = vunpack.c.l.s4 1966171168
    %v187 = vunpack.c.0.s8 %v186
    %v188 = vlaneseq
    %v189 = vshrl.u32 %v188, 7
    %v190 = vsub.s32 %v187, %v189
    %v191 = vrot.slane %v180, %v190
    %v192 = vcombine.high %v191, %v191
    %v194 = vunpack.c.l.s4 1966171168
    %v195 = vunpack.c.0.s8 %v194
    %v196 = vlaneseq
    %v197 = vshrl.u32 %v196, 7
    %v198 = vsub.s32 %v195, %v197
    %v199 = vrot.slane %v191, %v198
    %v201 = vunpack.c.l.s4 1966171168
    %v202 = vunpack.c.0.s8 %v201
    %v203 = vlaneseq
    %v204 = vshrl.u32 %v203, 7
    %v205 = vsub.s32 %v202, %v204
    %v206 = vrot.slane %v192, %v205
    %v207 = vadd.f32 %v180, 1.0
    %v210 = vunpack.c.l.s4 1966171168
    %v211 = vunpack.c.0.s8 %v210
    %v212 = vlaneseq
    %v213 = vshrl.u32 %v212, 7
    %v214 = vsub.s32 %v211, %v213
    %v215 = vrot.slane %v207, %v214
    %v216 = vcombine.high %v215, %v215
    %v218 = vunpack.c.l.s4 1966171168
    %v219 = vunpack.c.0.s8 %v218
    %v220 = vlaneseq
    %v221 = vshrl.u32 %v220, 7
    %v222 = vsub.s32 %v219, %v221
    %v223 = vrot.slane %v215, %v222
    %v225 = vunpack.c.l.s4 1966171168
    %v226 = vunpack.c.0.s8 %v225
    %v227 = vlaneseq
    %v228 = vshrl.u32 %v227, 7
    %v229 = vsub.s32 %v226, %v228
    %v230 = vrot.slane %v216, %v229
    %v231 = vadd.f32 %v182, 1.0
    %v234 = vunpack.c.l.s4 1966171168
    %v235 = vunpack.c.0.s8 %v234
    %v236 = vlaneseq
    %v237 = vshrl.u32 %v236, 7
    %v238 = vsub.s32 %v235, %v237
    %v239 = vrot.slane %v231, %v238
    %v240 = vcombine.high %v239, %v239
    %v242 = vunpack.c.l.s4 1966171168
    %v243 = vunpack.c.0.s8 %v242
    %v244 = vlaneseq
    %v245 = vshrl.u32 %v244, 7
    %v246 = vsub.s32 %v243, %v245
    %v247 = vrot.slane %v239, %v246
    %v249 = vunpack.c.l.s4 1966171168
    %v250 = vunpack.c.0.s8 %v249
    %v251 = vlaneseq
    %v252 = vshrl.u32 %v251, 7
    %v253 = vsub.s32 %v250, %v252
    %v254 = vrot.slane %v240, %v253
    %v257 = vunpack.c.l.s4 1966171168
    %v258 = vunpack.c.0.s8 %v257
    %v259 = vlaneseq
    %v260 = vshrl.u32 %v259, 7
    %v261 = vsub.s32 %v258, %v260
    %v262 = vrot.slane %v182, %v261
    %v263 = vcombine.high %v262, %v262
    %v265 = vunpack.c.l.s4 1966171168
    %v266 = vunpack.c.0.s8 %v265
    %v267 = vlaneseq
    %v268 = vshrl.u32 %v267, 7
    %v269 = vsub.s32 %v266, %v268
    %v270 = vrot.slane %v262, %v269
    %v272 = vunpack.c.l.s4 1966171168
    %v273 = vunpack.c.0.s8 %v272
    %v274 = vlaneseq
    %v275 = vshrl.u32 %v274, 7
    %v276 = vsub.s32 %v273, %v275
    %v277 = vrot.slane %v263, %v276
    %v278 = vsel %vm109, %v79, 0.0
    %279 = vadd.xlane.f32.xlu0 %v278
    %v280 = vpop.xlane.xlu0 %279
    %v281 = vsel %vm109, %v80, 0.0
    %282 = vadd.xlane.f32.xlu0 %v281
    %v283 = vpop.xlane.xlu0 %282
    %v284 = vrcp.pop 32.0
    %v285 = vmul.f32 %v280, %v284
    %v286 = vmul.f32 %v283, %v284
    %v287 = vmul.f32 %v79, %v79
    %v288 = vmul.f32 %v80, %v80
    %v289 = vsel %vm109, %v287, 0.0
    %290 = vadd.xlane.f32.xlu0 %v289
    %v291 = vpop.xlane.xlu0 %290
    %v292 = vsel %vm109, %v288, 0.0
    %293 = vadd.xlane.f32.xlu0 %v292
    %v294 = vpop.xlane.xlu0 %293
    %v295 = vmul.f32 %v291, %v284
    %v296 = vmul.f32 %v294, %v284
    %v297 = vmul.f32 %v285, %v285
    %v298 = vmul.f32 %v286, %v286
    %v299 = vsub.f32 %v295, %v297
    %v300 = vsub.f32 %v296, %v298
    %v301 = vsub.f32 %v79, %v285
    %v302 = vsub.f32 %v80, %v286
    %v303 = vadd.f32 %v299, 1e-06
    %v304 = vadd.f32 %v300, 1e-06
    %v305 = vrsqrt.pop %v303
    %v306 = vrsqrt.pop %v304
    %v307 = vmul.f32 %v301, %v305
    %v308 = vmul.f32 %v302, %v306
    %v309 = vlaneseq
    %v310 = vshrl.u32 %v309, 7
    %v311 = vsub.s32 0, %v310
    %v312 = vrot.slane %v223, %v311
    %v313 = vlaneseq
    %v314 = vshrl.u32 %v313, 7
    %v315 = vsub.s32 0, %v314
    %v316 = vrot.slane %v230, %v315
    %317 = vrot.lane.b32.xlu0 %v312, 96
    %v318 = vpop.permute.xlu0 %317
    %319 = vrot.lane.b32.xlu0 %v316, 96
    %v320 = vpop.permute.xlu0 %319
    %v323 = vmul.f32 %v307, %v318
    %v324 = vmul.f32 %v308, %v320
    %v325 = vlaneseq
    %v326 = vshrl.u32 %v325, 7
    %v327 = vsub.s32 0, %v326
    %v328 = vrot.slane %v199, %v327
    %v329 = vlaneseq
    %v330 = vshrl.u32 %v329, 7
    %v331 = vsub.s32 0, %v330
    %v332 = vrot.slane %v206, %v331
    %v335 = vadd.f32 %v323, %v328
    %v336 = vadd.f32 %v324, %v332
    %v337 = vld [vmem:[%s4] sm:$0xff]
    %v338 = vld [vmem:[%s4 + $0x8] sm:$0xff]
    %v339 = vld [vmem:[%s4 + $0x10] sm:$0xff]
    %v340 = vld [vmem:[%s4 + $0x18] sm:$0xff]
    %v341 = vld [vmem:[%s5] sm:$0x1]
    %v343 = vlaneseq
    %v344 = vshrl.u32 %v343, 7
    %v345 = vsub.s32 0, %v344
    %v346 = vrot.slane %v341, %v345
    %v349 = vsel %vm109, %v335, 0
    %v352 = vsel %vm109, %v336, 0
    %354 = vmatprep.subr.mxu0 0.0
    %355 = vmatpush1.msra.mxu0 %v337
    %356 = vmatprep.subr.mxu0 0.0
    %357 = vmatpush1.msra.mxu0 %v338
    %358 = vmatprep.subr.mxu0 0.0
    %359 = vmatpush1.msra.mxu0 %v339
    %360 = vmatprep.subr.mxu0 0.0
    %361 = vmatpush1.msra.mxu0 %v340
    %362 = vmatprep.subr.mxu0 0.0
    %363 = vmatpush1.msra.mxu0 0.0
    %364 = vmatprep.subr.mxu0 0.0
    %365 = vmatpush1.msra.mxu0 0.0
    %366 = vmatprep.subr.mxu0 0.0
    %367 = vmatpush1.msra.mxu0 0.0
    %368 = vmatprep.subr.mxu0 0.0
    %369 = vmatpush1.msra.mxu0 0.0
    %370 = vmatprep.subr.mxu0 0.0
    %371 = vmatpush1.msra.mxu0 0.0
    %372 = vmatprep.subr.mxu0 0.0
    %373 = vmatpush1.msra.mxu0 0.0
    %374 = vmatprep.subr.mxu0 0.0
    %375 = vmatpush1.msra.mxu0 0.0
    %376 = vmatprep.subr.mxu0 0.0
    %377 = vmatpush1.msra.mxu0 0.0
    %378 = vmatprep.subr.mxu0 0.0
    %379 = vmatpush1.msra.mxu0 0.0
    %380 = vmatprep.subr.mxu0 0.0
    %381 = vmatpush1.msra.mxu0 0.0
    %382 = vmatprep.subr.mxu0 0.0
    %383 = vmatpush1.msra.mxu0 0.0
    %384 = vmatprep.subr.mxu0 0.0
    %385 = vmatpush1.msra.mxu0 0.0
    %386 = vmatprep.subr.mxu0 0.0
    %387 = vmatpush1.msra.mxu0 0.0
    %388 = vmatprep.subr.mxu0 0.0
    %389 = vmatpush1.msra.mxu0 0.0
    %390 = vmatprep.subr.mxu0 0.0
    %391 = vmatpush1.msra.mxu0 0.0
    %392 = vmatprep.subr.mxu0 0.0
    %393 = vmatpush1.msra.mxu0 0.0
    %394 = vmatprep.subr.mxu0 0.0
    %395 = vmatpush1.msra.mxu0 0.0
    %396 = vmatprep.subr.mxu0 0.0
    %397 = vmatpush1.msra.mxu0 0.0
    %398 = vmatprep.subr.mxu0 0.0
    %399 = vmatpush1.msra.mxu0 0.0
    %400 = vmatprep.subr.mxu0 0.0
    %401 = vmatpush1.msra.mxu0 0.0
    %402 = vmatprep.subr.mxu0 0.0
    %403 = vmatpush1.msra.mxu0 0.0
    %404 = vmatprep.subr.mxu0 0.0
    %405 = vmatpush1.msra.mxu0 0.0
    %406 = vmatprep.subr.mxu0 0.0
    %407 = vmatpush1.msra.mxu0 0.0
    %408 = vmatprep.subr.mxu0 0.0
    %409 = vmatpush1.msra.mxu0 0.0
    %410 = vmatprep.subr.mxu0 0.0
    %411 = vmatpush1.msra.mxu0 0.0
    %412 = vmatprep.subr.mxu0 0.0
    %413 = vmatpush1.msra.mxu0 0.0
    %414 = vmatprep.subr.mxu0 0.0
    %415 = vmatpush1.msra.mxu0 0.0
    %416 = vmatprep.subr.mxu0 0.0
    %417 = vmatpush1.msra.mxu0 0.0
    %418 = vmatprep.mubr.f32.mxu0 0.0
    %419 = vmatmul.mubr.f32.gmra.mrb[0].mxu0 %v349
    %v420 = vpop.f32.mrb[0].mxu0
    %v421 = vadd.f32 %v346, %v420
    %v422 = vpop.f32.mrb[0].mxu0
    %423 = vmatprep.mubr.f32.mxu0 0.0
    %424 = vmatmul.mubr.f32.gmra.mrb[0].mxu0 %v352
    %v425 = vpop.f32.mrb[0].mxu0
    %v426 = vadd.f32 %v346, %v425
    %v427 = vpop.f32.mrb[0].mxu0
    %428 = vdwg.mxu0
    %430 = vrot.lane.b32.xlu0 %v421, 96
    %v431 = vpop.permute.xlu0 %430
    %vm432 = vcmask 64512
    %v433 = vsel %vm432, %v421, 0
    %v435 = vsel %vm432, %v431, 0
    %437 = vmatprep.subr.mxu0 0.0
    %438 = vmatpush1.xpose.msra.mxu0 %v435
    %439 = vmatprep.subr.mxu0 0.0
    %440 = vmatpush1.xpose.msra.mxu0 0.0
    %441 = vmatprep.subr.mxu0 0.0
    %442 = vmatpush1.xpose.msra.mxu0 0.0
    %443 = vmatprep.subr.mxu0 0.0
    %444 = vmatpush1.xpose.msra.mxu0 0.0
    %445 = vmatprep.subr.mxu0 0.0
    %446 = vmatpush1.xpose.msra.mxu0 0.0
    %447 = vmatprep.subr.mxu0 0.0
    %448 = vmatpush1.xpose.msra.mxu0 0.0
    %449 = vmatprep.subr.mxu0 0.0
    %450 = vmatpush1.xpose.msra.mxu0 0.0
    %451 = vmatprep.subr.mxu0 0.0
    %452 = vmatpush1.xpose.msra.mxu0 0.0
    %453 = vmatprep.subr.mxu0 0.0
    %454 = vmatpush1.xpose.msra.mxu0 0.0
    %455 = vmatprep.subr.mxu0 0.0
    %456 = vmatpush1.xpose.msra.mxu0 0.0
    %457 = vmatprep.subr.mxu0 0.0
    %458 = vmatpush1.xpose.msra.mxu0 0.0
    %459 = vmatprep.subr.mxu0 0.0
    %460 = vmatpush1.xpose.msra.mxu0 0.0
    %461 = vmatprep.subr.mxu0 0.0
    %462 = vmatpush1.xpose.msra.mxu0 0.0
    %463 = vmatprep.subr.mxu0 0.0
    %464 = vmatpush1.xpose.msra.mxu0 0.0
    %465 = vmatprep.subr.mxu0 0.0
    %466 = vmatpush1.xpose.msra.mxu0 0.0
    %467 = vmatprep.subr.mxu0 0.0
    %468 = vmatpush1.xpose.msra.mxu0 0.0
    %469 = vmatprep.subr.mxu0 0.0
    %470 = vmatpush1.xpose.msra.mxu0 0.0
    %471 = vmatprep.subr.mxu0 0.0
    %472 = vmatpush1.xpose.msra.mxu0 0.0
    %473 = vmatprep.subr.mxu0 0.0
    %474 = vmatpush1.xpose.msra.mxu0 0.0
    %475 = vmatprep.subr.mxu0 0.0
    %476 = vmatpush1.xpose.msra.mxu0 0.0
    %477 = vmatprep.subr.mxu0 0.0
    %478 = vmatpush1.xpose.msra.mxu0 0.0
    %479 = vmatprep.subr.mxu0 0.0
    %480 = vmatpush1.xpose.msra.mxu0 0.0
    %481 = vmatprep.subr.mxu0 0.0
    %482 = vmatpush1.xpose.msra.mxu0 0.0
    %483 = vmatprep.subr.mxu0 0.0
    %484 = vmatpush1.xpose.msra.mxu0 0.0
    %485 = vmatprep.subr.mxu0 0.0
    %486 = vmatpush1.xpose.msra.mxu0 0.0
    %487 = vmatprep.subr.mxu0 0.0
    %488 = vmatpush1.xpose.msra.mxu0 0.0
    %489 = vmatprep.subr.mxu0 0.0
    %490 = vmatpush1.xpose.msra.mxu0 0.0
    %491 = vmatprep.subr.mxu0 0.0
    %492 = vmatpush1.xpose.msra.mxu0 0.0
    %493 = vmatprep.subr.mxu0 0.0
    %494 = vmatpush1.xpose.msra.mxu0 0.0
    %495 = vmatprep.subr.mxu0 0.0
    %496 = vmatpush1.xpose.msra.mxu0 0.0
    %497 = vmatprep.subr.mxu0 0.0
    %498 = vmatpush1.xpose.msra.mxu0 0.0
    %499 = vmatprep.subr.mxu0 0.0
    %500 = vmatpush1.xpose.msra.mxu0 0.0
    %501 = vmatprep.mubr.f32.mxu0 0.0
    %502 = vmatmul.mubr.f32.gmra.mrb[0].mxu0 %v433
    %v503 = vpop.f32.mrb[0].mxu0
    %v504 = vadd.f32 0.0, %v503
    %v505 = vpop.f32.mrb[0].mxu0
    %506 = vdwg.mxu0
    %508 = vrot.lane.b32.xlu0 %v426, 96
    %v509 = vpop.permute.xlu0 %508
    %v510 = vsel %vm432, %v426, 0
    %v512 = vsel %vm432, %v509, 0
    %514 = vmatprep.subr.mxu0 0.0
    %515 = vmatpush1.xpose.msra.mxu0 %v512
    %516 = vmatprep.subr.mxu0 0.0
    %517 = vmatpush1.xpose.msra.mxu0 0.0
    %518 = vmatprep.subr.mxu0 0.0
    %519 = vmatpush1.xpose.msra.mxu0 0.0
    %520 = vmatprep.subr.mxu0 0.0
    %521 = vmatpush1.xpose.msra.mxu0 0.0
    %522 = vmatprep.subr.mxu0 0.0
    %523 = vmatpush1.xpose.msra.mxu0 0.0
    %524 = vmatprep.subr.mxu0 0.0
    %525 = vmatpush1.xpose.msra.mxu0 0.0
    %526 = vmatprep.subr.mxu0 0.0
    %527 = vmatpush1.xpose.msra.mxu0 0.0
    %528 = vmatprep.subr.mxu0 0.0
    %529 = vmatpush1.xpose.msra.mxu0 0.0
    %530 = vmatprep.subr.mxu0 0.0
    %531 = vmatpush1.xpose.msra.mxu0 0.0
    %532 = vmatprep.subr.mxu0 0.0
    %533 = vmatpush1.xpose.msra.mxu0 0.0
    %534 = vmatprep.subr.mxu0 0.0
    %535 = vmatpush1.xpose.msra.mxu0 0.0
    %536 = vmatprep.subr.mxu0 0.0
    %537 = vmatpush1.xpose.msra.mxu0 0.0
    %538 = vmatprep.subr.mxu0 0.0
    %539 = vmatpush1.xpose.msra.mxu0 0.0
    %540 = vmatprep.subr.mxu0 0.0
    %541 = vmatpush1.xpose.msra.mxu0 0.0
    %542 = vmatprep.subr.mxu0 0.0
    %543 = vmatpush1.xpose.msra.mxu0 0.0
    %544 = vmatprep.subr.mxu0 0.0
    %545 = vmatpush1.xpose.msra.mxu0 0.0
    %546 = vmatprep.subr.mxu0 0.0
    %547 = vmatpush1.xpose.msra.mxu0 0.0
    %548 = vmatprep.subr.mxu0 0.0
    %549 = vmatpush1.xpose.msra.mxu0 0.0
    %550 = vmatprep.subr.mxu0 0.0
    %551 = vmatpush1.xpose.msra.mxu0 0.0
    %552 = vmatprep.subr.mxu0 0.0
    %553 = vmatpush1.xpose.msra.mxu0 0.0
    %554 = vmatprep.subr.mxu0 0.0
    %555 = vmatpush1.xpose.msra.mxu0 0.0
    %556 = vmatprep.subr.mxu0 0.0
    %557 = vmatpush1.xpose.msra.mxu0 0.0
    %558 = vmatprep.subr.mxu0 0.0
    %559 = vmatpush1.xpose.msra.mxu0 0.0
    %560 = vmatprep.subr.mxu0 0.0
    %561 = vmatpush1.xpose.msra.mxu0 0.0
    %562 = vmatprep.subr.mxu0 0.0
    %563 = vmatpush1.xpose.msra.mxu0 0.0
    %564 = vmatprep.subr.mxu0 0.0
    %565 = vmatpush1.xpose.msra.mxu0 0.0
    %566 = vmatprep.subr.mxu0 0.0
    %567 = vmatpush1.xpose.msra.mxu0 0.0
    %568 = vmatprep.subr.mxu0 0.0
    %569 = vmatpush1.xpose.msra.mxu0 0.0
    %570 = vmatprep.subr.mxu0 0.0
    %571 = vmatpush1.xpose.msra.mxu0 0.0
    %572 = vmatprep.subr.mxu0 0.0
    %573 = vmatpush1.xpose.msra.mxu0 0.0
    %574 = vmatprep.subr.mxu0 0.0
    %575 = vmatpush1.xpose.msra.mxu0 0.0
    %576 = vmatprep.subr.mxu0 0.0
    %577 = vmatpush1.xpose.msra.mxu0 0.0
    %578 = vmatprep.mubr.f32.mxu0 0.0
    %579 = vmatmul.mubr.f32.gmra.mrb[0].mxu0 %v510
    %v580 = vpop.f32.mrb[0].mxu0
    %v581 = vadd.f32 0.0, %v580
    %v582 = vpop.f32.mrb[0].mxu0
    %583 = vdwg.mxu0
    %v584 = vmul.f32 %v504, 0.35355338
    %v585 = vmul.f32 %v581, 0.35355338
    %v586 = vsel %vm432, %v584, -inf
    %587 = vmax.xlane.f32.xlu0 %v586
    %v588 = vpop.xlane.xlu0 %587
    %v589 = vsel %vm432, %v585, -inf
    %590 = vmax.xlane.f32.xlu0 %v589
    %v591 = vpop.xlane.xlu0 %590
    %v592 = vsub.f32 %v584, %v588
    %v593 = vsub.f32 %v585, %v591
    %v594 = vmul.f32 %v592, 1.442695
    %v595 = vpow.pop %v594
    %v596 = vmul.f32 %v593, 1.442695
    %v597 = vpow.pop %v596
    %v598 = vsel %vm432, %v595, 0.0
    %599 = vadd.xlane.f32.xlu0 %v598
    %v600 = vpop.xlane.xlu0 %599
    %v601 = vsel %vm432, %v597, 0.0
    %602 = vadd.xlane.f32.xlu0 %v601
    %v603 = vpop.xlane.xlu0 %602
    %v604 = vrcp.pop %v600
    %v605 = vmul.f32 %v595, %v604
    %v606 = vrcp.pop %v603
    %v607 = vmul.f32 %v597, %v606
    %608 = vrot.lane.b32.xlu0 %v421, 64
    %v609 = vpop.permute.xlu0 %608
    %v612 = vsel %vm432, %v605, 0
    %614 = vmatprep.subr.mxu0 0.0
    %615 = vmatpush1.msra.mxu0 %v609
    %616 = vmatprep.subr.mxu0 0.0
    %617 = vmatpush1.msra.mxu0 0.0
    %618 = vmatprep.subr.mxu0 0.0
    %619 = vmatpush1.msra.mxu0 0.0
    %620 = vmatprep.subr.mxu0 0.0
    %621 = vmatpush1.msra.mxu0 0.0
    %622 = vmatprep.subr.mxu0 0.0
    %623 = vmatpush1.msra.mxu0 0.0
    %624 = vmatprep.subr.mxu0 0.0
    %625 = vmatpush1.msra.mxu0 0.0
    %626 = vmatprep.subr.mxu0 0.0
    %627 = vmatpush1.msra.mxu0 0.0
    %628 = vmatprep.subr.mxu0 0.0
    %629 = vmatpush1.msra.mxu0 0.0
    %630 = vmatprep.subr.mxu0 0.0
    %631 = vmatpush1.msra.mxu0 0.0
    %632 = vmatprep.subr.mxu0 0.0
    %633 = vmatpush1.msra.mxu0 0.0
    %634 = vmatprep.subr.mxu0 0.0
    %635 = vmatpush1.msra.mxu0 0.0
    %636 = vmatprep.subr.mxu0 0.0
    %637 = vmatpush1.msra.mxu0 0.0
    %638 = vmatprep.subr.mxu0 0.0
    %639 = vmatpush1.msra.mxu0 0.0
    %640 = vmatprep.subr.mxu0 0.0
    %641 = vmatpush1.msra.mxu0 0.0
    %642 = vmatprep.subr.mxu0 0.0
    %643 = vmatpush1.msra.mxu0 0.0
    %644 = vmatprep.subr.mxu0 0.0
    %645 = vmatpush1.msra.mxu0 0.0
    %646 = vmatprep.subr.mxu0 0.0
    %647 = vmatpush1.msra.mxu0 0.0
    %648 = vmatprep.subr.mxu0 0.0
    %649 = vmatpush1.msra.mxu0 0.0
    %650 = vmatprep.subr.mxu0 0.0
    %651 = vmatpush1.msra.mxu0 0.0
    %652 = vmatprep.subr.mxu0 0.0
    %653 = vmatpush1.msra.mxu0 0.0
    %654 = vmatprep.subr.mxu0 0.0
    %655 = vmatpush1.msra.mxu0 0.0
    %656 = vmatprep.subr.mxu0 0.0
    %657 = vmatpush1.msra.mxu0 0.0
    %658 = vmatprep.subr.mxu0 0.0
    %659 = vmatpush1.msra.mxu0 0.0
    %660 = vmatprep.subr.mxu0 0.0
    %661 = vmatpush1.msra.mxu0 0.0
    %662 = vmatprep.subr.mxu0 0.0
    %663 = vmatpush1.msra.mxu0 0.0
    %664 = vmatprep.subr.mxu0 0.0
    %665 = vmatpush1.msra.mxu0 0.0
    %666 = vmatprep.subr.mxu0 0.0
    %667 = vmatpush1.msra.mxu0 0.0
    %668 = vmatprep.subr.mxu0 0.0
    %669 = vmatpush1.msra.mxu0 0.0
    %670 = vmatprep.subr.mxu0 0.0
    %671 = vmatpush1.msra.mxu0 0.0
    %672 = vmatprep.subr.mxu0 0.0
    %673 = vmatpush1.msra.mxu0 0.0
    %674 = vmatprep.subr.mxu0 0.0
    %675 = vmatpush1.msra.mxu0 0.0
    %676 = vmatprep.subr.mxu0 0.0
    %677 = vmatpush1.msra.mxu0 0.0
    %678 = vmatprep.mubr.f32.mxu0 0.0
    %679 = vmatmul.mubr.f32.gmra.mrb[0].mxu0 %v612
    %v680 = vpop.f32.mrb[0].mxu0
    %v681 = vadd.f32 0.0, %v680
    %v682 = vpop.f32.mrb[0].mxu0
    %683 = vdwg.mxu0
    %684 = vrot.lane.b32.xlu0 %v426, 64
    %v685 = vpop.permute.xlu0 %684
    %v688 = vsel %vm432, %v607, 0
    %690 = vmatprep.subr.mxu0 0.0
    %691 = vmatpush1.msra.mxu0 %v685
    %692 = vmatprep.subr.mxu0 0.0
    %693 = vmatpush1.msra.mxu0 0.0
    %694 = vmatprep.subr.mxu0 0.0
    %695 = vmatpush1.msra.mxu0 0.0
    %696 = vmatprep.subr.mxu0 0.0
    %697 = vmatpush1.msra.mxu0 0.0
    %698 = vmatprep.subr.mxu0 0.0
    %699 = vmatpush1.msra.mxu0 0.0
    %700 = vmatprep.subr.mxu0 0.0
    %701 = vmatpush1.msra.mxu0 0.0
    %702 = vmatprep.subr.mxu0 0.0
    %703 = vmatpush1.msra.mxu0 0.0
    %704 = vmatprep.subr.mxu0 0.0
    %705 = vmatpush1.msra.mxu0 0.0
    %706 = vmatprep.subr.mxu0 0.0
    %707 = vmatpush1.msra.mxu0 0.0
    %708 = vmatprep.subr.mxu0 0.0
    %709 = vmatpush1.msra.mxu0 0.0
    %710 = vmatprep.subr.mxu0 0.0
    %711 = vmatpush1.msra.mxu0 0.0
    %712 = vmatprep.subr.mxu0 0.0
    %713 = vmatpush1.msra.mxu0 0.0
    %714 = vmatprep.subr.mxu0 0.0
    %715 = vmatpush1.msra.mxu0 0.0
    %716 = vmatprep.subr.mxu0 0.0
    %717 = vmatpush1.msra.mxu0 0.0
    %718 = vmatprep.subr.mxu0 0.0
    %719 = vmatpush1.msra.mxu0 0.0
    %720 = vmatprep.subr.mxu0 0.0
    %721 = vmatpush1.msra.mxu0 0.0
    %722 = vmatprep.subr.mxu0 0.0
    %723 = vmatpush1.msra.mxu0 0.0
    %724 = vmatprep.subr.mxu0 0.0
    %725 = vmatpush1.msra.mxu0 0.0
    %726 = vmatprep.subr.mxu0 0.0
    %727 = vmatpush1.msra.mxu0 0.0
    %728 = vmatprep.subr.mxu0 0.0
    %729 = vmatpush1.msra.mxu0 0.0
    %730 = vmatprep.subr.mxu0 0.0
    %731 = vmatpush1.msra.mxu0 0.0
    %732 = vmatprep.subr.mxu0 0.0
    %733 = vmatpush1.msra.mxu0 0.0
    %734 = vmatprep.subr.mxu0 0.0
    %735 = vmatpush1.msra.mxu0 0.0
    %736 = vmatprep.subr.mxu0 0.0
    %737 = vmatpush1.msra.mxu0 0.0
    %738 = vmatprep.subr.mxu0 0.0
    %739 = vmatpush1.msra.mxu0 0.0
    %740 = vmatprep.subr.mxu0 0.0
    %741 = vmatpush1.msra.mxu0 0.0
    %742 = vmatprep.subr.mxu0 0.0
    %743 = vmatpush1.msra.mxu0 0.0
    %744 = vmatprep.subr.mxu0 0.0
    %745 = vmatpush1.msra.mxu0 0.0
    %746 = vmatprep.subr.mxu0 0.0
    %747 = vmatpush1.msra.mxu0 0.0
    %748 = vmatprep.subr.mxu0 0.0
    %749 = vmatpush1.msra.mxu0 0.0
    %750 = vmatprep.subr.mxu0 0.0
    %751 = vmatpush1.msra.mxu0 0.0
    %752 = vmatprep.subr.mxu0 0.0
    %753 = vmatpush1.msra.mxu0 0.0
    %754 = vmatprep.mubr.f32.mxu0 0.0
    %755 = vmatmul.mubr.f32.gmra.mrb[0].mxu0 %v688
    %v756 = vpop.f32.mrb[0].mxu0
    %v757 = vadd.f32 0.0, %v756
    %v758 = vpop.f32.mrb[0].mxu0
    %759 = vdwg.mxu0
    %760 = vst.msk [vmem:[#allocation2] sm:$0xff] %vm432, %v681
    %761 = vst.msk [vmem:[#allocation2 + $0x8] sm:$0xff] %vm432, %v757
    %762 = vrot.lane.b32.xlu0 %v421, 120
    %v763 = vpop.permute.xlu0 %762
    %764 = vrot.lane.b32.xlu0 %v421, 88
    %v765 = vpop.permute.xlu0 %764
    %v766 = vsel %vm432, %v763, 0
    %v768 = vsel %vm432, %v765, 0
    %770 = vmatprep.subr.mxu0 0.0
    %771 = vmatpush1.xpose.msra.mxu0 %v768
    %772 = vmatprep.subr.mxu0 0.0
    %773 = vmatpush1.xpose.msra.mxu0 0.0
    %774 = vmatprep.subr.mxu0 0.0
    %775 = vmatpush1.xpose.msra.mxu0 0.0
    %776 = vmatprep.subr.mxu0 0.0
    %777 = vmatpush1.xpose.msra.mxu0 0.0
    %778 = vmatprep.subr.mxu0 0.0
    %779 = vmatpush1.xpose.msra.mxu0 0.0
    %780 = vmatprep.subr.mxu0 0.0
    %781 = vmatpush1.xpose.msra.mxu0 0.0
    %782 = vmatprep.subr.mxu0 0.0
    %783 = vmatpush1.xpose.msra.mxu0 0.0
    %784 = vmatprep.subr.mxu0 0.0
    %785 = vmatpush1.xpose.msra.mxu0 0.0
    %786 = vmatprep.subr.mxu0 0.0
    %787 = vmatpush1.xpose.msra.mxu0 0.0
    %788 = vmatprep.subr.mxu0 0.0
    %789 = vmatpush1.xpose.msra.mxu0 0.0
    %790 = vmatprep.subr.mxu0 0.0
    %791 = vmatpush1.xpose.msra.mxu0 0.0
    %792 = vmatprep.subr.mxu0 0.0
    %793 = vmatpush1.xpose.msra.mxu0 0.0
    %794 = vmatprep.subr.mxu0 0.0
    %795 = vmatpush1.xpose.msra.mxu0 0.0
    %796 = vmatprep.subr.mxu0 0.0
    %797 = vmatpush1.xpose.msra.mxu0 0.0
    %798 = vmatprep.subr.mxu0 0.0
    %799 = vmatpush1.xpose.msra.mxu0 0.0
    %800 = vmatprep.subr.mxu0 0.0
    %801 = vmatpush1.xpose.msra.mxu0 0.0
    %802 = vmatprep.subr.mxu0 0.0
    %803 = vmatpush1.xpose.msra.mxu0 0.0
    %804 = vmatprep.subr.mxu0 0.0
    %805 = vmatpush1.xpose.msra.mxu0 0.0
    %806 = vmatprep.subr.mxu0 0.0
    %807 = vmatpush1.xpose.msra.mxu0 0.0
    %808 = vmatprep.subr.mxu0 0.0
    %809 = vmatpush1.xpose.msra.mxu0 0.0
    %810 = vmatprep.subr.mxu0 0.0
    %811 = vmatpush1.xpose.msra.mxu0 0.0
    %812 = vmatprep.subr.mxu0 0.0
    %813 = vmatpush1.xpose.msra.mxu0 0.0
    %814 = vmatprep.subr.mxu0 0.0
    %815 = vmatpush1.xpose.msra.mxu0 0.0
    %816 = vmatprep.subr.mxu0 0.0
    %817 = vmatpush1.xpose.msra.mxu0 0.0
    %818 = vmatprep.subr.mxu0 0.0
    %819 = vmatpush1.xpose.msra.mxu0 0.0
    %820 = vmatprep.subr.mxu0 0.0
    %821 = vmatpush1.xpose.msra.mxu0 0.0
    %822 = vmatprep.subr.mxu0 0.0
    %823 = vmatpush1.xpose.msra.mxu0 0.0
    %824 = vmatprep.subr.mxu0 0.0
    %825 = vmatpush1.xpose.msra.mxu0 0.0
    %826 = vmatprep.subr.mxu0 0.0
    %827 = vmatpush1.xpose.msra.mxu0 0.0
    %828 = vmatprep.subr.mxu0 0.0
    %829 = vmatpush1.xpose.msra.mxu0 0.0
    %830 = vmatprep.subr.mxu0 0.0
    %831 = vmatpush1.xpose.msra.mxu0 0.0
    %832 = vmatprep.subr.mxu0 0.0
    %833 = vmatpush1.xpose.msra.mxu0 0.0
    %834 = vmatprep.mubr.f32.mxu0 0.0
    %835 = vmatmul.mubr.f32.gmra.mrb[0].mxu0 %v766
    %v836 = vpop.f32.mrb[0].mxu0
    %v837 = vadd.f32 0.0, %v836
    %v838 = vpop.f32.mrb[0].mxu0
    %839 = vdwg.mxu0
    %840 = vrot.lane.b32.xlu0 %v426, 120
    %v841 = vpop.permute.xlu0 %840
    %842 = vrot.lane.b32.xlu0 %v426, 88
    %v843 = vpop.permute.xlu0 %842
    %v844 = vsel %vm432, %v841, 0
    %v846 = vsel %vm432, %v843, 0
    %848 = vmatprep.subr.mxu0 0.0
    %849 = vmatpush1.xpose.msra.mxu0 %v846
    %850 = vmatprep.subr.mxu0 0.0
    %851 = vmatpush1.xpose.msra.mxu0 0.0
    %852 = vmatprep.subr.mxu0 0.0
    %853 = vmatpush1.xpose.msra.mxu0 0.0
    %854 = vmatprep.subr.mxu0 0.0
    %855 = vmatpush1.xpose.msra.mxu0 0.0
    %856 = vmatprep.subr.mxu0 0.0
    %857 = vmatpush1.xpose.msra.mxu0 0.0
    %858 = vmatprep.subr.mxu0 0.0
    %859 = vmatpush1.xpose.msra.mxu0 0.0
    %860 = vmatprep.subr.mxu0 0.0
    %861 = vmatpush1.xpose.msra.mxu0 0.0
    %862 = vmatprep.subr.mxu0 0.0
    %863 = vmatpush1.xpose.msra.mxu0 0.0
    %864 = vmatprep.subr.mxu0 0.0
    %865 = vmatpush1.xpose.msra.mxu0 0.0
    %866 = vmatprep.subr.mxu0 0.0
    %867 = vmatpush1.xpose.msra.mxu0 0.0
    %868 = vmatprep.subr.mxu0 0.0
    %869 = vmatpush1.xpose.msra.mxu0 0.0
    %870 = vmatprep.subr.mxu0 0.0
    %871 = vmatpush1.xpose.msra.mxu0 0.0
    %872 = vmatprep.subr.mxu0 0.0
    %873 = vmatpush1.xpose.msra.mxu0 0.0
    %874 = vmatprep.subr.mxu0 0.0
    %875 = vmatpush1.xpose.msra.mxu0 0.0
    %876 = vmatprep.subr.mxu0 0.0
    %877 = vmatpush1.xpose.msra.mxu0 0.0
    %878 = vmatprep.subr.mxu0 0.0
    %879 = vmatpush1.xpose.msra.mxu0 0.0
    %880 = vmatprep.subr.mxu0 0.0
    %881 = vmatpush1.xpose.msra.mxu0 0.0
    %882 = vmatprep.subr.mxu0 0.0
    %883 = vmatpush1.xpose.msra.mxu0 0.0
    %884 = vmatprep.subr.mxu0 0.0
    %885 = vmatpush1.xpose.msra.mxu0 0.0
    %886 = vmatprep.subr.mxu0 0.0
    %887 = vmatpush1.xpose.msra.mxu0 0.0
    %888 = vmatprep.subr.mxu0 0.0
    %889 = vmatpush1.xpose.msra.mxu0 0.0
    %890 = vmatprep.subr.mxu0 0.0
    %891 = vmatpush1.xpose.msra.mxu0 0.0
    %892 = vmatprep.subr.mxu0 0.0
    %893 = vmatpush1.xpose.msra.mxu0 0.0
    %894 = vmatprep.subr.mxu0 0.0
    %895 = vmatpush1.xpose.msra.mxu0 0.0
    %896 = vmatprep.subr.mxu0 0.0
    %897 = vmatpush1.xpose.msra.mxu0 0.0
    %898 = vmatprep.subr.mxu0 0.0
    %899 = vmatpush1.xpose.msra.mxu0 0.0
    %900 = vmatprep.subr.mxu0 0.0
    %901 = vmatpush1.xpose.msra.mxu0 0.0
    %902 = vmatprep.subr.mxu0 0.0
    %903 = vmatpush1.xpose.msra.mxu0 0.0
    %904 = vmatprep.subr.mxu0 0.0
    %905 = vmatpush1.xpose.msra.mxu0 0.0
    %906 = vmatprep.subr.mxu0 0.0
    %907 = vmatpush1.xpose.msra.mxu0 0.0
    %908 = vmatprep.subr.mxu0 0.0
    %909 = vmatpush1.xpose.msra.mxu0 0.0
    %910 = vmatprep.subr.mxu0 0.0
    %911 = vmatpush1.xpose.msra.mxu0 0.0
    %912 = vmatprep.mubr.f32.mxu0 0.0
    %913 = vmatmul.mubr.f32.gmra.mrb[0].mxu0 %v844
    %v914 = vpop.f32.mrb[0].mxu0
    %v915 = vadd.f32 0.0, %v914
    %v916 = vpop.f32.mrb[0].mxu0
    %917 = vdwg.mxu0
    %v918 = vmul.f32 %v837, 0.35355338
    %v919 = vmul.f32 %v915, 0.35355338
    %v920 = vsel %vm432, %v918, -inf
    %921 = vmax.xlane.f32.xlu0 %v920
    %v922 = vpop.xlane.xlu0 %921
    %v923 = vsel %vm432, %v919, -inf
    %924 = vmax.xlane.f32.xlu0 %v923
    %v925 = vpop.xlane.xlu0 %924
    %v926 = vsub.f32 %v918, %v922
    %v927 = vsub.f32 %v919, %v925
    %v928 = vmul.f32 %v926, 1.442695
    %v929 = vpow.pop %v928
    %v930 = vmul.f32 %v927, 1.442695
    %v931 = vpow.pop %v930
    %v932 = vsel %vm432, %v929, 0.0
    %933 = vadd.xlane.f32.xlu0 %v932
    %v934 = vpop.xlane.xlu0 %933
    %v935 = vsel %vm432, %v931, 0.0
    %936 = vadd.xlane.f32.xlu0 %v935
    %v937 = vpop.xlane.xlu0 %936
    %v938 = vrcp.pop %v934
    %v939 = vmul.f32 %v929, %v938
    %v940 = vrcp.pop %v937
    %v941 = vmul.f32 %v931, %v940
    %942 = vrot.lane.b32.xlu0 %v421, 56
    %v943 = vpop.permute.xlu0 %942
    %v946 = vsel %vm432, %v939, 0
    %948 = vmatprep.subr.mxu0 0.0
    %949 = vmatpush1.msra.mxu0 %v943
    %950 = vmatprep.subr.mxu0 0.0
    %951 = vmatpush1.msra.mxu0 0.0
    %952 = vmatprep.subr.mxu0 0.0
    %953 = vmatpush1.msra.mxu0 0.0
    %954 = vmatprep.subr.mxu0 0.0
    %955 = vmatpush1.msra.mxu0 0.0
    %956 = vmatprep.subr.mxu0 0.0
    %957 = vmatpush1.msra.mxu0 0.0
    %958 = vmatprep.subr.mxu0 0.0
    %959 = vmatpush1.msra.mxu0 0.0
    %960 = vmatprep.subr.mxu0 0.0
    %961 = vmatpush1.msra.mxu0 0.0
    %962 = vmatprep.subr.mxu0 0.0
    %963 = vmatpush1.msra.mxu0 0.0
    %964 = vmatprep.subr.mxu0 0.0
    %965 = vmatpush1.msra.mxu0 0.0
    %966 = vmatprep.subr.mxu0 0.0
    %967 = vmatpush1.msra.mxu0 0.0
    %968 = vmatprep.subr.mxu0 0.0
    %969 = vmatpush1.msra.mxu0 0.0
    %970 = vmatprep.subr.mxu0 0.0
    %971 = vmatpush1.msra.mxu0 0.0
    %972 = vmatprep.subr.mxu0 0.0
    %973 = vmatpush1.msra.mxu0 0.0
    %974 = vmatprep.subr.mxu0 0.0
    %975 = vmatpush1.msra.mxu0 0.0
    %976 = vmatprep.subr.mxu0 0.0
    %977 = vmatpush1.msra.mxu0 0.0
    %978 = vmatprep.subr.mxu0 0.0
    %979 = vmatpush1.msra.mxu0 0.0
    %980 = vmatprep.subr.mxu0 0.0
    %981 = vmatpush1.msra.mxu0 0.0
    %982 = vmatprep.subr.mxu0 0.0
    %983 = vmatpush1.msra.mxu0 0.0
    %984 = vmatprep.subr.mxu0 0.0
    %985 = vmatpush1.msra.mxu0 0.0
    %986 = vmatprep.subr.mxu0 0.0
    %987 = vmatpush1.msra.mxu0 0.0
    %988 = vmatprep.subr.mxu0 0.0
    %989 = vmatpush1.msra.mxu0 0.0
    %990 = vmatprep.subr.mxu0 0.0
    %991 = vmatpush1.msra.mxu0 0.0
    %992 = vmatprep.subr.mxu0 0.0
    %993 = vmatpush1.msra.mxu0 0.0
    %994 = vmatprep.subr.mxu0 0.0
    %995 = vmatpush1.msra.mxu0 0.0
    %996 = vmatprep.subr.mxu0 0.0
    %997 = vmatpush1.msra.mxu0 0.0
    %998 = vmatprep.subr.mxu0 0.0
    %999 = vmatpush1.msra.mxu0 0.0
    %1000 = vmatprep.subr.mxu0 0.0
    %1001 = vmatpush1.msra.mxu0 0.0
    %1002 = vmatprep.subr.mxu0 0.0
    %1003 = vmatpush1.msra.mxu0 0.0
    %1004 = vmatprep.subr.mxu0 0.0
    %1005 = vmatpush1.msra.mxu0 0.0
    %1006 = vmatprep.subr.mxu0 0.0
    %1007 = vmatpush1.msra.mxu0 0.0
    %1008 = vmatprep.subr.mxu0 0.0
    %1009 = vmatpush1.msra.mxu0 0.0
    %1010 = vmatprep.subr.mxu0 0.0
    %1011 = vmatpush1.msra.mxu0 0.0
    %1012 = vmatprep.mubr.f32.mxu0 0.0
    %1013 = vmatmul.mubr.f32.gmra.mrb[0].mxu0 %v946
    %v1014 = vpop.f32.mrb[0].mxu0
    %v1015 = vadd.f32 0.0, %v1014
    %v1016 = vpop.f32.mrb[0].mxu0
    %1017 = vdwg.mxu0
    %1018 = vrot.lane.b32.xlu0 %v426, 56
    %v1019 = vpop.permute.xlu0 %1018
    %v1022 = vsel %vm432, %v941, 0
    %1024 = vmatprep.subr.mxu0 0.0
    %1025 = vmatpush1.msra.mxu0 %v1019
    %1026 = vmatprep.subr.mxu0 0.0
    %1027 = vmatpush1.msra.mxu0 0.0
    %1028 = vmatprep.subr.mxu0 0.0
    %1029 = vmatpush1.msra.mxu0 0.0
    %1030 = vmatprep.subr.mxu0 0.0
    %1031 = vmatpush1.msra.mxu0 0.0
    %1032 = vmatprep.subr.mxu0 0.0
    %1033 = vmatpush1.msra.mxu0 0.0
    %1034 = vmatprep.subr.mxu0 0.0
    %1035 = vmatpush1.msra.mxu0 0.0
    %1036 = vmatprep.subr.mxu0 0.0
    %1037 = vmatpush1.msra.mxu0 0.0
    %1038 = vmatprep.subr.mxu0 0.0
    %1039 = vmatpush1.msra.mxu0 0.0
    %1040 = vmatprep.subr.mxu0 0.0
    %1041 = vmatpush1.msra.mxu0 0.0
    %1042 = vmatprep.subr.mxu0 0.0
    %1043 = vmatpush1.msra.mxu0 0.0
    %1044 = vmatprep.subr.mxu0 0.0
    %1045 = vmatpush1.msra.mxu0 0.0
    %1046 = vmatprep.subr.mxu0 0.0
    %1047 = vmatpush1.msra.mxu0 0.0
    %1048 = vmatprep.subr.mxu0 0.0
    %1049 = vmatpush1.msra.mxu0 0.0
    %1050 = vmatprep.subr.mxu0 0.0
    %1051 = vmatpush1.msra.mxu0 0.0
    %1052 = vmatprep.subr.mxu0 0.0
    %1053 = vmatpush1.msra.mxu0 0.0
    %1054 = vmatprep.subr.mxu0 0.0
    %1055 = vmatpush1.msra.mxu0 0.0
    %1056 = vmatprep.subr.mxu0 0.0
    %1057 = vmatpush1.msra.mxu0 0.0
    %1058 = vmatprep.subr.mxu0 0.0
    %1059 = vmatpush1.msra.mxu0 0.0
    %1060 = vmatprep.subr.mxu0 0.0
    %1061 = vmatpush1.msra.mxu0 0.0
    %1062 = vmatprep.subr.mxu0 0.0
    %1063 = vmatpush1.msra.mxu0 0.0
    %1064 = vmatprep.subr.mxu0 0.0
    %1065 = vmatpush1.msra.mxu0 0.0
    %1066 = vmatprep.subr.mxu0 0.0
    %1067 = vmatpush1.msra.mxu0 0.0
    %1068 = vmatprep.subr.mxu0 0.0
    %1069 = vmatpush1.msra.mxu0 0.0
    %1070 = vmatprep.subr.mxu0 0.0
    %1071 = vmatpush1.msra.mxu0 0.0
    %1072 = vmatprep.subr.mxu0 0.0
    %1073 = vmatpush1.msra.mxu0 0.0
    %1074 = vmatprep.subr.mxu0 0.0
    %1075 = vmatpush1.msra.mxu0 0.0
    %1076 = vmatprep.subr.mxu0 0.0
    %1077 = vmatpush1.msra.mxu0 0.0
    %1078 = vmatprep.subr.mxu0 0.0
    %1079 = vmatpush1.msra.mxu0 0.0
    %1080 = vmatprep.subr.mxu0 0.0
    %1081 = vmatpush1.msra.mxu0 0.0
    %1082 = vmatprep.subr.mxu0 0.0
    %1083 = vmatpush1.msra.mxu0 0.0
    %1084 = vmatprep.subr.mxu0 0.0
    %1085 = vmatpush1.msra.mxu0 0.0
    %1086 = vmatprep.subr.mxu0 0.0
    %1087 = vmatpush1.msra.mxu0 0.0
    %1088 = vmatprep.mubr.f32.mxu0 0.0
    %1089 = vmatmul.mubr.f32.gmra.mrb[0].mxu0 %v1022
    %v1090 = vpop.f32.mrb[0].mxu0
    %v1091 = vadd.f32 0.0, %v1090
    %v1092 = vpop.f32.mrb[0].mxu0
    %1093 = vdwg.mxu0
    %1096 = vrot.lane.b32.xlu0 %v1015, 8
    %v1097 = vpop.permute.xlu0 %1096
    %1098 = vrot.lane.b32.xlu0 %v1091, 8
    %v1099 = vpop.permute.xlu0 %1098
    %vm1102 = vcmask 130112
    %1103 = vst.msk [vmem:[#allocation2] sm:$0xff] %vm1102, %v1097
    %1104 = vst.msk [vmem:[#allocation2 + $0x8] sm:$0xff] %vm1102, %v1099
    %1105 = vrot.lane.b32.xlu0 %v421, 112
    %v1106 = vpop.permute.xlu0 %1105
    %1107 = vrot.lane.b32.xlu0 %v421, 80
    %v1108 = vpop.permute.xlu0 %1107
    %v1109 = vsel %vm432, %v1106, 0
    %v1111 = vsel %vm432, %v1108, 0
    %1113 = vmatprep.subr.mxu0 0.0
    %1114 = vmatpush1.xpose.msra.mxu0 %v1111
    %1115 = vmatprep.subr.mxu0 0.0
    %1116 = vmatpush1.xpose.msra.mxu0 0.0
    %1117 = vmatprep.subr.mxu0 0.0
    %1118 = vmatpush1.xpose.msra.mxu0 0.0
    %1119 = vmatprep.subr.mxu0 0.0
    %1120 = vmatpush1.xpose.msra.mxu0 0.0
    %1121 = vmatprep.subr.mxu0 0.0
    %1122 = vmatpush1.xpose.msra.mxu0 0.0
    %1123 = vmatprep.subr.mxu0 0.0
    %1124 = vmatpush1.xpose.msra.mxu0 0.0
    %1125 = vmatprep.subr.mxu0 0.0
    %1126 = vmatpush1.xpose.msra.mxu0 0.0
    %1127 = vmatprep.subr.mxu0 0.0
    %1128 = vmatpush1.xpose.msra.mxu0 0.0
    %1129 = vmatprep.subr.mxu0 0.0
    %1130 = vmatpush1.xpose.msra.mxu0 0.0
    %1131 = vmatprep.subr.mxu0 0.0
    %1132 = vmatpush1.xpose.msra.mxu0 0.0
    %1133 = vmatprep.subr.mxu0 0.0
    %1134 = vmatpush1.xpose.msra.mxu0 0.0
    %1135 = vmatprep.subr.mxu0 0.0
    %1136 = vmatpush1.xpose.msra.mxu0 0.0
    %1137 = vmatprep.subr.mxu0 0.0
    %1138 = vmatpush1.xpose.msra.mxu0 0.0
    %1139 = vmatprep.subr.mxu0 0.0
    %1140 = vmatpush1.xpose.msra.mxu0 0.0
    %1141 = vmatprep.subr.mxu0 0.0
    %1142 = vmatpush1.xpose.msra.mxu0 0.0
    %1143 = vmatprep.subr.mxu0 0.0
    %1144 = vmatpush1.xpose.msra.mxu0 0.0
    %1145 = vmatprep.subr.mxu0 0.0
    %1146 = vmatpush1.xpose.msra.mxu0 0.0
    %1147 = vmatprep.subr.mxu0 0.0
    %1148 = vmatpush1.xpose.msra.mxu0 0.0
    %1149 = vmatprep.subr.mxu0 0.0
    %1150 = vmatpush1.xpose.msra.mxu0 0.0
    %1151 = vmatprep.subr.mxu0 0.0
    %1152 = vmatpush1.xpose.msra.mxu0 0.0
    %1153 = vmatprep.subr.mxu0 0.0
    %1154 = vmatpush1.xpose.msra.mxu0 0.0
    %1155 = vmatprep.subr.mxu0 0.0
    %1156 = vmatpush1.xpose.msra.mxu0 0.0
    %1157 = vmatprep.subr.mxu0 0.0
    %1158 = vmatpush1.xpose.msra.mxu0 0.0
    %1159 = vmatprep.subr.mxu0 0.0
    %1160 = vmatpush1.xpose.msra.mxu0 0.0
    %1161 = vmatprep.subr.mxu0 0.0
    %1162 = vmatpush1.xpose.msra.mxu0 0.0
    %1163 = vmatprep.subr.mxu0 0.0
    %1164 = vmatpush1.xpose.msra.mxu0 0.0
    %1165 = vmatprep.subr.mxu0 0.0
    %1166 = vmatpush1.xpose.msra.mxu0 0.0
    %1167 = vmatprep.subr.mxu0 0.0
    %1168 = vmatpush1.xpose.msra.mxu0 0.0
    %1169 = vmatprep.subr.mxu0 0.0
    %1170 = vmatpush1.xpose.msra.mxu0 0.0
    %1171 = vmatprep.subr.mxu0 0.0
    %1172 = vmatpush1.xpose.msra.mxu0 0.0
    %1173 = vmatprep.subr.mxu0 0.0
    %1174 = vmatpush1.xpose.msra.mxu0 0.0
    %1175 = vmatprep.subr.mxu0 0.0
    %1176 = vmatpush1.xpose.msra.mxu0 0.0
    %1177 = vmatprep.mubr.f32.mxu0 0.0
    %1178 = vmatmul.mubr.f32.gmra.mrb[0].mxu0 %v1109
    %v1179 = vpop.f32.mrb[0].mxu0
    %v1180 = vadd.f32 0.0, %v1179
    %v1181 = vpop.f32.mrb[0].mxu0
    %1182 = vdwg.mxu0
    %1183 = vrot.lane.b32.xlu0 %v426, 112
    %v1184 = vpop.permute.xlu0 %1183
    %1185 = vrot.lane.b32.xlu0 %v426, 80
    %v1186 = vpop.permute.xlu0 %1185
    %v1187 = vsel %vm432, %v1184, 0
    %v1189 = vsel %vm432, %v1186, 0
    %1191 = vmatprep.subr.mxu0 0.0
    %1192 = vmatpush1.xpose.msra.mxu0 %v1189
    %1193 = vmatprep.subr.mxu0 0.0
    %1194 = vmatpush1.xpose.msra.mxu0 0.0
    %1195 = vmatprep.subr.mxu0 0.0
    %1196 = vmatpush1.xpose.msra.mxu0 0.0
    %1197 = vmatprep.subr.mxu0 0.0
    %1198 = vmatpush1.xpose.msra.mxu0 0.0
    %1199 = vmatprep.subr.mxu0 0.0
    %1200 = vmatpush1.xpose.msra.mxu0 0.0
    %1201 = vmatprep.subr.mxu0 0.0
    %1202 = vmatpush1.xpose.msra.mxu0 0.0
    %1203 = vmatprep.subr.mxu0 0.0
    %1204 = vmatpush1.xpose.msra.mxu0 0.0
    %1205 = vmatprep.subr.mxu0 0.0
    %1206 = vmatpush1.xpose.msra.mxu0 0.0
    %1207 = vmatprep.subr.mxu0 0.0
    %1208 = vmatpush1.xpose.msra.mxu0 0.0
    %1209 = vmatprep.subr.mxu0 0.0
    %1210 = vmatpush1.xpose.msra.mxu0 0.0
    %1211 = vmatprep.subr.mxu0 0.0
    %1212 = vmatpush1.xpose.msra.mxu0 0.0
    %1213 = vmatprep.subr.mxu0 0.0
    %1214 = vmatpush1.xpose.msra.mxu0 0.0
    %1215 = vmatprep.subr.mxu0 0.0
    %1216 = vmatpush1.xpose.msra.mxu0 0.0
    %1217 = vmatprep.subr.mxu0 0.0
    %1218 = vmatpush1.xpose.msra.mxu0 0.0
    %1219 = vmatprep.subr.mxu0 0.0
    %1220 = vmatpush1.xpose.msra.mxu0 0.0
    %1221 = vmatprep.subr.mxu0 0.0
    %1222 = vmatpush1.xpose.msra.mxu0 0.0
    %1223 = vmatprep.subr.mxu0 0.0
    %1224 = vmatpush1.xpose.msra.mxu0 0.0
    %1225 = vmatprep.subr.mxu0 0.0
    %1226 = vmatpush1.xpose.msra.mxu0 0.0
    %1227 = vmatprep.subr.mxu0 0.0
    %1228 = vmatpush1.xpose.msra.mxu0 0.0
    %1229 = vmatprep.subr.mxu0 0.0
    %1230 = vmatpush1.xpose.msra.mxu0 0.0
    %1231 = vmatprep.subr.mxu0 0.0
    %1232 = vmatpush1.xpose.msra.mxu0 0.0
    %1233 = vmatprep.subr.mxu0 0.0
    %1234 = vmatpush1.xpose.msra.mxu0 0.0
    %1235 = vmatprep.subr.mxu0 0.0
    %1236 = vmatpush1.xpose.msra.mxu0 0.0
    %1237 = vmatprep.subr.mxu0 0.0
    %1238 = vmatpush1.xpose.msra.mxu0 0.0
    %1239 = vmatprep.subr.mxu0 0.0
    %1240 = vmatpush1.xpose.msra.mxu0 0.0
    %1241 = vmatprep.subr.mxu0 0.0
    %1242 = vmatpush1.xpose.msra.mxu0 0.0
    %1243 = vmatprep.subr.mxu0 0.0
    %1244 = vmatpush1.xpose.msra.mxu0 0.0
    %1245 = vmatprep.subr.mxu0 0.0
    %1246 = vmatpush1.xpose.msra.mxu0 0.0
    %1247 = vmatprep.subr.mxu0 0.0
    %1248 = vmatpush1.xpose.msra.mxu0 0.0
    %1249 = vmatprep.subr.mxu0 0.0
    %1250 = vmatpush1.xpose.msra.mxu0 0.0
    %1251 = vmatprep.subr.mxu0 0.0
    %1252 = vmatpush1.xpose.msra.mxu0 0.0
    %1253 = vmatprep.subr.mxu0 0.0
    %1254 = vmatpush1.xpose.msra.mxu0 0.0
    %1255 = vmatprep.mubr.f32.mxu0 0.0
    %1256 = vmatmul.mubr.f32.gmra.mrb[0].mxu0 %v1187
    %v1257 = vpop.f32.mrb[0].mxu0
    %v1258 = vadd.f32 0.0, %v1257
    %v1259 = vpop.f32.mrb[0].mxu0
    %1260 = vdwg.mxu0
    %v1261 = vmul.f32 %v1180, 0.35355338
    %v1262 = vmul.f32 %v1258, 0.35355338
    %v1263 = vsel %vm432, %v1261, -inf
    %1264 = vmax.xlane.f32.xlu0 %v1263
    %v1265 = vpop.xlane.xlu0 %1264
    %v1266 = vsel %vm432, %v1262, -inf
    %1267 = vmax.xlane.f32.xlu0 %v1266
    %v1268 = vpop.xlane.xlu0 %1267
    %v1269 = vsub.f32 %v1261, %v1265
    %v1270 = vsub.f32 %v1262, %v1268
    %v1271 = vmul.f32 %v1269, 1.442695
    %v1272 = vpow.pop %v1271
    %v1273 = vmul.f32 %v1270, 1.442695
    %v1274 = vpow.pop %v1273
    %v1275 = vsel %vm432, %v1272, 0.0
    %1276 = vadd.xlane.f32.xlu0 %v1275
    %v1277 = vpop.xlane.xlu0 %1276
    %v1278 = vsel %vm432, %v1274, 0.0
    %1279 = vadd.xlane.f32.xlu0 %v1278
    %v1280 = vpop.xlane.xlu0 %1279
    %v1281 = vrcp.pop %v1277
    %v1282 = vmul.f32 %v1272, %v1281
    %v1283 = vrcp.pop %v1280
    %v1284 = vmul.f32 %v1274, %v1283
    %1285 = vrot.lane.b32.xlu0 %v421, 48
    %v1286 = vpop.permute.xlu0 %1285
    %v1289 = vsel %vm432, %v1282, 0
    %1291 = vmatprep.subr.mxu0 0.0
    %1292 = vmatpush1.msra.mxu0 %v1286
    %1293 = vmatprep.subr.mxu0 0.0
    %1294 = vmatpush1.msra.mxu0 0.0
    %1295 = vmatprep.subr.mxu0 0.0
    %1296 = vmatpush1.msra.mxu0 0.0
    %1297 = vmatprep.subr.mxu0 0.0
    %1298 = vmatpush1.msra.mxu0 0.0
    %1299 = vmatprep.subr.mxu0 0.0
    %1300 = vmatpush1.msra.mxu0 0.0
    %1301 = vmatprep.subr.mxu0 0.0
    %1302 = vmatpush1.msra.mxu0 0.0
    %1303 = vmatprep.subr.mxu0 0.0
    %1304 = vmatpush1.msra.mxu0 0.0
    %1305 = vmatprep.subr.mxu0 0.0
    %1306 = vmatpush1.msra.mxu0 0.0
    %1307 = vmatprep.subr.mxu0 0.0
    %1308 = vmatpush1.msra.mxu0 0.0
    %1309 = vmatprep.subr.mxu0 0.0
    %1310 = vmatpush1.msra.mxu0 0.0
    %1311 = vmatprep.subr.mxu0 0.0
    %1312 = vmatpush1.msra.mxu0 0.0
    %1313 = vmatprep.subr.mxu0 0.0
    %1314 = vmatpush1.msra.mxu0 0.0
    %1315 = vmatprep.subr.mxu0 0.0
    %1316 = vmatpush1.msra.mxu0 0.0
    %1317 = vmatprep.subr.mxu0 0.0
    %1318 = vmatpush1.msra.mxu0 0.0
    %1319 = vmatprep.subr.mxu0 0.0
    %1320 = vmatpush1.msra.mxu0 0.0
    %1321 = vmatprep.subr.mxu0 0.0
    %1322 = vmatpush1.msra.mxu0 0.0
    %1323 = vmatprep.subr.mxu0 0.0
    %1324 = vmatpush1.msra.mxu0 0.0
    %1325 = vmatprep.subr.mxu0 0.0
    %1326 = vmatpush1.msra.mxu0 0.0
    %1327 = vmatprep.subr.mxu0 0.0
    %1328 = vmatpush1.msra.mxu0 0.0
    %1329 = vmatprep.subr.mxu0 0.0
    %1330 = vmatpush1.msra.mxu0 0.0
    %1331 = vmatprep.subr.mxu0 0.0
    %1332 = vmatpush1.msra.mxu0 0.0
    %1333 = vmatprep.subr.mxu0 0.0
    %1334 = vmatpush1.msra.mxu0 0.0
    %1335 = vmatprep.subr.mxu0 0.0
    %1336 = vmatpush1.msra.mxu0 0.0
    %1337 = vmatprep.subr.mxu0 0.0
    %1338 = vmatpush1.msra.mxu0 0.0
    %1339 = vmatprep.subr.mxu0 0.0
    %1340 = vmatpush1.msra.mxu0 0.0
    %1341 = vmatprep.subr.mxu0 0.0
    %1342 = vmatpush1.msra.mxu0 0.0
    %1343 = vmatprep.subr.mxu0 0.0
    %1344 = vmatpush1.msra.mxu0 0.0
    %1345 = vmatprep.subr.mxu0 0.0
    %1346 = vmatpush1.msra.mxu0 0.0
    %1347 = vmatprep.subr.mxu0 0.0
    %1348 = vmatpush1.msra.mxu0 0.0
    %1349 = vmatprep.subr.mxu0 0.0
    %1350 = vmatpush1.msra.mxu0 0.0
    %1351 = vmatprep.subr.mxu0 0.0
    %1352 = vmatpush1.msra.mxu0 0.0
    %1353 = vmatprep.subr.mxu0 0.0
    %1354 = vmatpush1.msra.mxu0 0.0
    %1355 = vmatprep.mubr.f32.mxu0 0.0
    %1356 = vmatmul.mubr.f32.gmra.mrb[0].mxu0 %v1289
    %v1357 = vpop.f32.mrb[0].mxu0
    %v1358 = vadd.f32 0.0, %v1357
    %v1359 = vpop.f32.mrb[0].mxu0
    %1360 = vdwg.mxu0
    %1361 = vrot.lane.b32.xlu0 %v426, 48
    %v1362 = vpop.permute.xlu0 %1361
    %v1365 = vsel %vm432, %v1284, 0
    %1367 = vmatprep.subr.mxu0 0.0
    %1368 = vmatpush1.msra.mxu0 %v1362
    %1369 = vmatprep.subr.mxu0 0.0
    %1370 = vmatpush1.msra.mxu0 0.0
    %1371 = vmatprep.subr.mxu0 0.0
    %1372 = vmatpush1.msra.mxu0 0.0
    %1373 = vmatprep.subr.mxu0 0.0
    %1374 = vmatpush1.msra.mxu0 0.0
    %1375 = vmatprep.subr.mxu0 0.0
    %1376 = vmatpush1.msra.mxu0 0.0
    %1377 = vmatprep.subr.mxu0 0.0
    %1378 = vmatpush1.msra.mxu0 0.0
    %1379 = vmatprep.subr.mxu0 0.0
    %1380 = vmatpush1.msra.mxu0 0.0
    %1381 = vmatprep.subr.mxu0 0.0
    %1382 = vmatpush1.msra.mxu0 0.0
    %1383 = vmatprep.subr.mxu0 0.0
    %1384 = vmatpush1.msra.mxu0 0.0
    %1385 = vmatprep.subr.mxu0 0.0
    %1386 = vmatpush1.msra.mxu0 0.0
    %1387 = vmatprep.subr.mxu0 0.0
    %1388 = vmatpush1.msra.mxu0 0.0
    %1389 = vmatprep.subr.mxu0 0.0
    %1390 = vmatpush1.msra.mxu0 0.0
    %1391 = vmatprep.subr.mxu0 0.0
    %1392 = vmatpush1.msra.mxu0 0.0
    %1393 = vmatprep.subr.mxu0 0.0
    %1394 = vmatpush1.msra.mxu0 0.0
    %1395 = vmatprep.subr.mxu0 0.0
    %1396 = vmatpush1.msra.mxu0 0.0
    %1397 = vmatprep.subr.mxu0 0.0
    %1398 = vmatpush1.msra.mxu0 0.0
    %1399 = vmatprep.subr.mxu0 0.0
    %1400 = vmatpush1.msra.mxu0 0.0
    %1401 = vmatprep.subr.mxu0 0.0
    %1402 = vmatpush1.msra.mxu0 0.0
    %1403 = vmatprep.subr.mxu0 0.0
    %1404 = vmatpush1.msra.mxu0 0.0
    %1405 = vmatprep.subr.mxu0 0.0
    %1406 = vmatpush1.msra.mxu0 0.0
    %1407 = vmatprep.subr.mxu0 0.0
    %1408 = vmatpush1.msra.mxu0 0.0
    %1409 = vmatprep.subr.mxu0 0.0
    %1410 = vmatpush1.msra.mxu0 0.0
    %1411 = vmatprep.subr.mxu0 0.0
    %1412 = vmatpush1.msra.mxu0 0.0
    %1413 = vmatprep.subr.mxu0 0.0
    %1414 = vmatpush1.msra.mxu0 0.0
    %1415 = vmatprep.subr.mxu0 0.0
    %1416 = vmatpush1.msra.mxu0 0.0
    %1417 = vmatprep.subr.mxu0 0.0
    %1418 = vmatpush1.msra.mxu0 0.0
    %1419 = vmatprep.subr.mxu0 0.0
    %1420 = vmatpush1.msra.mxu0 0.0
    %1421 = vmatprep.subr.mxu0 0.0
    %1422 = vmatpush1.msra.mxu0 0.0
    %1423 = vmatprep.subr.mxu0 0.0
    %1424 = vmatpush1.msra.mxu0 0.0
    %1425 = vmatprep.subr.mxu0 0.0
    %1426 = vmatpush1.msra.mxu0 0.0
    %1427 = vmatprep.subr.mxu0 0.0
    %1428 = vmatpush1.msra.mxu0 0.0
    %1429 = vmatprep.subr.mxu0 0.0
    %1430 = vmatpush1.msra.mxu0 0.0
    %1431 = vmatprep.mubr.f32.mxu0 0.0
    %1432 = vmatmul.mubr.f32.gmra.mrb[0].mxu0 %v1365
    %v1433 = vpop.f32.mrb[0].mxu0
    %v1434 = vadd.f32 0.0, %v1433
    %v1435 = vpop.f32.mrb[0].mxu0
    %1436 = vdwg.mxu0
    %1439 = vrot.lane.b32.xlu0 %v1358, 16
    %v1440 = vpop.permute.xlu0 %1439
    %1441 = vrot.lane.b32.xlu0 %v1434, 16
    %v1442 = vpop.permute.xlu0 %1441
    %vm1445 = vcmask 195712
    %1446 = vst.msk [vmem:[#allocation2] sm:$0xff] %vm1445, %v1440
    %1447 = vst.msk [vmem:[#allocation2 + $0x8] sm:$0xff] %vm1445, %v1442
    %1448 = vrot.lane.b32.xlu0 %v421, 104
    %v1449 = vpop.permute.xlu0 %1448
    %1450 = vrot.lane.b32.xlu0 %v421, 72
    %v1451 = vpop.permute.xlu0 %1450
    %v1452 = vsel %vm432, %v1449, 0
    %v1454 = vsel %vm432, %v1451, 0
    %1456 = vmatprep.subr.mxu0 0.0
    %1457 = vmatpush1.xpose.msra.mxu0 %v1454
    %1458 = vmatprep.subr.mxu0 0.0
    %1459 = vmatpush1.xpose.msra.mxu0 0.0
    %1460 = vmatprep.subr.mxu0 0.0
    %1461 = vmatpush1.xpose.msra.mxu0 0.0
    %1462 = vmatprep.subr.mxu0 0.0
    %1463 = vmatpush1.xpose.msra.mxu0 0.0
    %1464 = vmatprep.subr.mxu0 0.0
    %1465 = vmatpush1.xpose.msra.mxu0 0.0
    %1466 = vmatprep.subr.mxu0 0.0
    %1467 = vmatpush1.xpose.msra.mxu0 0.0
    %1468 = vmatprep.subr.mxu0 0.0
    %1469 = vmatpush1.xpose.msra.mxu0 0.0
    %1470 = vmatprep.subr.mxu0 0.0
    %1471 = vmatpush1.xpose.msra.mxu0 0.0
    %1472 = vmatprep.subr.mxu0 0.0
    %1473 = vmatpush1.xpose.msra.mxu0 0.0
    %1474 = vmatprep.subr.mxu0 0.0
    %1475 = vmatpush1.xpose.msra.mxu0 0.0
    %1476 = vmatprep.subr.mxu0 0.0
    %1477 = vmatpush1.xpose.msra.mxu0 0.0
    %1478 = vmatprep.subr.mxu0 0.0
    %1479 = vmatpush1.xpose.msra.mxu0 0.0
    %1480 = vmatprep.subr.mxu0 0.0
    %1481 = vmatpush1.xpose.msra.mxu0 0.0
    %1482 = vmatprep.subr.mxu0 0.0
    %1483 = vmatpush1.xpose.msra.mxu0 0.0
    %1484 = vmatprep.subr.mxu0 0.0
    %1485 = vmatpush1.xpose.msra.mxu0 0.0
    %1486 = vmatprep.subr.mxu0 0.0
    %1487 = vmatpush1.xpose.msra.mxu0 0.0
    %1488 = vmatprep.subr.mxu0 0.0
    %1489 = vmatpush1.xpose.msra.mxu0 0.0
    %1490 = vmatprep.subr.mxu0 0.0
    %1491 = vmatpush1.xpose.msra.mxu0 0.0
    %1492 = vmatprep.subr.mxu0 0.0
    %1493 = vmatpush1.xpose.msra.mxu0 0.0
    %1494 = vmatprep.subr.mxu0 0.0
    %1495 = vmatpush1.xpose.msra.mxu0 0.0
    %1496 = vmatprep.subr.mxu0 0.0
    %1497 = vmatpush1.xpose.msra.mxu0 0.0
    %1498 = vmatprep.subr.mxu0 0.0
    %1499 = vmatpush1.xpose.msra.mxu0 0.0
    %1500 = vmatprep.subr.mxu0 0.0
    %1501 = vmatpush1.xpose.msra.mxu0 0.0
    %1502 = vmatprep.subr.mxu0 0.0
    %1503 = vmatpush1.xpose.msra.mxu0 0.0
    %1504 = vmatprep.subr.mxu0 0.0
    %1505 = vmatpush1.xpose.msra.mxu0 0.0
    %1506 = vmatprep.subr.mxu0 0.0
    %1507 = vmatpush1.xpose.msra.mxu0 0.0
    %1508 = vmatprep.subr.mxu0 0.0
    %1509 = vmatpush1.xpose.msra.mxu0 0.0
    %1510 = vmatprep.subr.mxu0 0.0
    %1511 = vmatpush1.xpose.msra.mxu0 0.0
    %1512 = vmatprep.subr.mxu0 0.0
    %1513 = vmatpush1.xpose.msra.mxu0 0.0
    %1514 = vmatprep.subr.mxu0 0.0
    %1515 = vmatpush1.xpose.msra.mxu0 0.0
    %1516 = vmatprep.subr.mxu0 0.0
    %1517 = vmatpush1.xpose.msra.mxu0 0.0
    %1518 = vmatprep.subr.mxu0 0.0
    %1519 = vmatpush1.xpose.msra.mxu0 0.0
    %1520 = vmatprep.mubr.f32.mxu0 0.0
    %1521 = vmatmul.mubr.f32.gmra.mrb[0].mxu0 %v1452
    %v1522 = vpop.f32.mrb[0].mxu0
    %v1523 = vadd.f32 0.0, %v1522
    %v1524 = vpop.f32.mrb[0].mxu0
    %1525 = vdwg.mxu0
    %1526 = vrot.lane.b32.xlu0 %v426, 104
    %v1527 = vpop.permute.xlu0 %1526
    %1528 = vrot.lane.b32.xlu0 %v426, 72
    %v1529 = vpop.permute.xlu0 %1528
    %v1530 = vsel %vm432, %v1527, 0
    %v1532 = vsel %vm432, %v1529, 0
    %1534 = vmatprep.subr.mxu0 0.0
    %1535 = vmatpush1.xpose.msra.mxu0 %v1532
    %1536 = vmatprep.subr.mxu0 0.0
    %1537 = vmatpush1.xpose.msra.mxu0 0.0
    %1538 = vmatprep.subr.mxu0 0.0
    %1539 = vmatpush1.xpose.msra.mxu0 0.0
    %1540 = vmatprep.subr.mxu0 0.0
    %1541 = vmatpush1.xpose.msra.mxu0 0.0
    %1542 = vmatprep.subr.mxu0 0.0
    %1543 = vmatpush1.xpose.msra.mxu0 0.0
    %1544 = vmatprep.subr.mxu0 0.0
    %1545 = vmatpush1.xpose.msra.mxu0 0.0
    %1546 = vmatprep.subr.mxu0 0.0
    %1547 = vmatpush1.xpose.msra.mxu0 0.0
    %1548 = vmatprep.subr.mxu0 0.0
    %1549 = vmatpush1.xpose.msra.mxu0 0.0
    %1550 = vmatprep.subr.mxu0 0.0
    %1551 = vmatpush1.xpose.msra.mxu0 0.0
    %1552 = vmatprep.subr.mxu0 0.0
    %1553 = vmatpush1.xpose.msra.mxu0 0.0
    %1554 = vmatprep.subr.mxu0 0.0
    %1555 = vmatpush1.xpose.msra.mxu0 0.0
    %1556 = vmatprep.subr.mxu0 0.0
    %1557 = vmatpush1.xpose.msra.mxu0 0.0
    %1558 = vmatprep.subr.mxu0 0.0
    %1559 = vmatpush1.xpose.msra.mxu0 0.0
    %1560 = vmatprep.subr.mxu0 0.0
    %1561 = vmatpush1.xpose.msra.mxu0 0.0
    %1562 = vmatprep.subr.mxu0 0.0
    %1563 = vmatpush1.xpose.msra.mxu0 0.0
    %1564 = vmatprep.subr.mxu0 0.0
    %1565 = vmatpush1.xpose.msra.mxu0 0.0
    %1566 = vmatprep.subr.mxu0 0.0
    %1567 = vmatpush1.xpose.msra.mxu0 0.0
    %1568 = vmatprep.subr.mxu0 0.0
    %1569 = vmatpush1.xpose.msra.mxu0 0.0
    %1570 = vmatprep.subr.mxu0 0.0
    %1571 = vmatpush1.xpose.msra.mxu0 0.0
    %1572 = vmatprep.subr.mxu0 0.0
    %1573 = vmatpush1.xpose.msra.mxu0 0.0
    %1574 = vmatprep.subr.mxu0 0.0
    %1575 = vmatpush1.xpose.msra.mxu0 0.0
    %1576 = vmatprep.subr.mxu0 0.0
    %1577 = vmatpush1.xpose.msra.mxu0 0.0
    %1578 = vmatprep.subr.mxu0 0.0
    %1579 = vmatpush1.xpose.msra.mxu0 0.0
    %1580 = vmatprep.subr.mxu0 0.0
    %1581 = vmatpush1.xpose.msra.mxu0 0.0
    %1582 = vmatprep.subr.mxu0 0.0
    %1583 = vmatpush1.xpose.msra.mxu0 0.0
    %1584 = vmatprep.subr.mxu0 0.0
    %1585 = vmatpush1.xpose.msra.mxu0 0.0
    %1586 = vmatprep.subr.mxu0 0.0
    %1587 = vmatpush1.xpose.msra.mxu0 0.0
    %1588 = vmatprep.subr.mxu0 0.0
    %1589 = vmatpush1.xpose.msra.mxu0 0.0
    %1590 = vmatprep.subr.mxu0 0.0
    %1591 = vmatpush1.xpose.msra.mxu0 0.0
    %1592 = vmatprep.subr.mxu0 0.0
    %1593 = vmatpush1.xpose.msra.mxu0 0.0
    %1594 = vmatprep.subr.mxu0 0.0
    %1595 = vmatpush1.xpose.msra.mxu0 0.0
    %1596 = vmatprep.subr.mxu0 0.0
    %1597 = vmatpush1.xpose.msra.mxu0 0.0
    %1598 = vmatprep.mubr.f32.mxu0 0.0
    %1599 = vmatmul.mubr.f32.gmra.mrb[0].mxu0 %v1530
    %v1600 = vpop.f32.mrb[0].mxu0
    %v1601 = vadd.f32 0.0, %v1600
    %v1602 = vpop.f32.mrb[0].mxu0
    %1603 = vdwg.mxu0
    %v1604 = vmul.f32 %v1523, 0.35355338
    %v1605 = vmul.f32 %v1601, 0.35355338
    %v1606 = vsel %vm432, %v1604, -inf
    %1607 = vmax.xlane.f32.xlu0 %v1606
    %v1608 = vpop.xlane.xlu0 %1607
    %v1609 = vsel %vm432, %v1605, -inf
    %1610 = vmax.xlane.f32.xlu0 %v1609
    %v1611 = vpop.xlane.xlu0 %1610
    %v1612 = vsub.f32 %v1604, %v1608
    %v1613 = vsub.f32 %v1605, %v1611
    %v1614 = vmul.f32 %v1612, 1.442695
    %v1615 = vpow.pop %v1614
    %v1616 = vmul.f32 %v1613, 1.442695
    %v1617 = vpow.pop %v1616
    %v1618 = vsel %vm432, %v1615, 0.0
    %1619 = vadd.xlane.f32.xlu0 %v1618
    %v1620 = vpop.xlane.xlu0 %1619
    %v1621 = vsel %vm432, %v1617, 0.0
    %1622 = vadd.xlane.f32.xlu0 %v1621
    %v1623 = vpop.xlane.xlu0 %1622
    %v1624 = vrcp.pop %v1620
    %v1625 = vmul.f32 %v1615, %v1624
    %v1626 = vrcp.pop %v1623
    %v1627 = vmul.f32 %v1617, %v1626
    %1628 = vrot.lane.b32.xlu0 %v421, 40
    %v1629 = vpop.permute.xlu0 %1628
    %v1632 = vsel %vm432, %v1625, 0
    %1634 = vmatprep.subr.mxu0 0.0
    %1635 = vmatpush1.msra.mxu0 %v1629
    %1636 = vmatprep.subr.mxu0 0.0
    %1637 = vmatpush1.msra.mxu0 0.0
    %1638 = vmatprep.subr.mxu0 0.0
    %1639 = vmatpush1.msra.mxu0 0.0
    %1640 = vmatprep.subr.mxu0 0.0
    %1641 = vmatpush1.msra.mxu0 0.0
    %1642 = vmatprep.subr.mxu0 0.0
    %1643 = vmatpush1.msra.mxu0 0.0
    %1644 = vmatprep.subr.mxu0 0.0
    %1645 = vmatpush1.msra.mxu0 0.0
    %1646 = vmatprep.subr.mxu0 0.0
    %1647 = vmatpush1.msra.mxu0 0.0
    %1648 = vmatprep.subr.mxu0 0.0
    %1649 = vmatpush1.msra.mxu0 0.0
    %1650 = vmatprep.subr.mxu0 0.0
    %1651 = vmatpush1.msra.mxu0 0.0
    %1652 = vmatprep.subr.mxu0 0.0
    %1653 = vmatpush1.msra.mxu0 0.0
    %1654 = vmatprep.subr.mxu0 0.0
    %1655 = vmatpush1.msra.mxu0 0.0
    %1656 = vmatprep.subr.mxu0 0.0
    %1657 = vmatpush1.msra.mxu0 0.0
    %1658 = vmatprep.subr.mxu0 0.0
    %1659 = vmatpush1.msra.mxu0 0.0
    %1660 = vmatprep.subr.mxu0 0.0
    %1661 = vmatpush1.msra.mxu0 0.0
    %1662 = vmatprep.subr.mxu0 0.0
    %1663 = vmatpush1.msra.mxu0 0.0
    %1664 = vmatprep.subr.mxu0 0.0
    %1665 = vmatpush1.msra.mxu0 0.0
    %1666 = vmatprep.subr.mxu0 0.0
    %1667 = vmatpush1.msra.mxu0 0.0
    %1668 = vmatprep.subr.mxu0 0.0
    %1669 = vmatpush1.msra.mxu0 0.0
    %1670 = vmatprep.subr.mxu0 0.0
    %1671 = vmatpush1.msra.mxu0 0.0
    %1672 = vmatprep.subr.mxu0 0.0
    %1673 = vmatpush1.msra.mxu0 0.0
    %1674 = vmatprep.subr.mxu0 0.0
    %1675 = vmatpush1.msra.mxu0 0.0
    %1676 = vmatprep.subr.mxu0 0.0
    %1677 = vmatpush1.msra.mxu0 0.0
    %1678 = vmatprep.subr.mxu0 0.0
    %1679 = vmatpush1.msra.mxu0 0.0
    %1680 = vmatprep.subr.mxu0 0.0
    %1681 = vmatpush1.msra.mxu0 0.0
    %1682 = vmatprep.subr.mxu0 0.0
    %1683 = vmatpush1.msra.mxu0 0.0
    %1684 = vmatprep.subr.mxu0 0.0
    %1685 = vmatpush1.msra.mxu0 0.0
    %1686 = vmatprep.subr.mxu0 0.0
    %1687 = vmatpush1.msra.mxu0 0.0
    %1688 = vmatprep.subr.mxu0 0.0
    %1689 = vmatpush1.msra.mxu0 0.0
    %1690 = vmatprep.subr.mxu0 0.0
    %1691 = vmatpush1.msra.mxu0 0.0
    %1692 = vmatprep.subr.mxu0 0.0
    %1693 = vmatpush1.msra.mxu0 0.0
    %1694 = vmatprep.subr.mxu0 0.0
    %1695 = vmatpush1.msra.mxu0 0.0
    %1696 = vmatprep.subr.mxu0 0.0
    %1697 = vmatpush1.msra.mxu0 0.0
    %1698 = vmatprep.mubr.f32.mxu0 0.0
    %1699 = vmatmul.mubr.f32.gmra.mrb[0].mxu0 %v1632
    %v1700 = vpop.f32.mrb[0].mxu0
    %v1701 = vadd.f32 0.0, %v1700
    %v1702 = vpop.f32.mrb[0].mxu0
    %1703 = vdwg.mxu0
    %1704 = vrot.lane.b32.xlu0 %v426, 40
    %v1705 = vpop.permute.xlu0 %1704
    %v1708 = vsel %vm432, %v1627, 0
    %1710 = vmatprep.subr.mxu0 0.0
    %1711 = vmatpush1.msra.mxu0 %v1705
    %1712 = vmatprep.subr.mxu0 0.0
    %1713 = vmatpush1.msra.mxu0 0.0
    %1714 = vmatprep.subr.mxu0 0.0
    %1715 = vmatpush1.msra.mxu0 0.0
    %1716 = vmatprep.subr.mxu0 0.0
    %1717 = vmatpush1.msra.mxu0 0.0
    %1718 = vmatprep.subr.mxu0 0.0
    %1719 = vmatpush1.msra.mxu0 0.0
    %1720 = vmatprep.subr.mxu0 0.0
    %1721 = vmatpush1.msra.mxu0 0.0
    %1722 = vmatprep.subr.mxu0 0.0
    %1723 = vmatpush1.msra.mxu0 0.0
    %1724 = vmatprep.subr.mxu0 0.0
    %1725 = vmatpush1.msra.mxu0 0.0
    %1726 = vmatprep.subr.mxu0 0.0
    %1727 = vmatpush1.msra.mxu0 0.0
    %1728 = vmatprep.subr.mxu0 0.0
    %1729 = vmatpush1.msra.mxu0 0.0
    %1730 = vmatprep.subr.mxu0 0.0
    %1731 = vmatpush1.msra.mxu0 0.0
    %1732 = vmatprep.subr.mxu0 0.0
    %1733 = vmatpush1.msra.mxu0 0.0
    %1734 = vmatprep.subr.mxu0 0.0
    %1735 = vmatpush1.msra.mxu0 0.0
    %1736 = vmatprep.subr.mxu0 0.0
    %1737 = vmatpush1.msra.mxu0 0.0
    %1738 = vmatprep.subr.mxu0 0.0
    %1739 = vmatpush1.msra.mxu0 0.0
    %1740 = vmatprep.subr.mxu0 0.0
    %1741 = vmatpush1.msra.mxu0 0.0
    %1742 = vmatprep.subr.mxu0 0.0
    %1743 = vmatpush1.msra.mxu0 0.0
    %1744 = vmatprep.subr.mxu0 0.0
    %1745 = vmatpush1.msra.mxu0 0.0
    %1746 = vmatprep.subr.mxu0 0.0
    %1747 = vmatpush1.msra.mxu0 0.0
    %1748 = vmatprep.subr.mxu0 0.0
    %1749 = vmatpush1.msra.mxu0 0.0
    %1750 = vmatprep.subr.mxu0 0.0
    %1751 = vmatpush1.msra.mxu0 0.0
    %1752 = vmatprep.subr.mxu0 0.0
    %1753 = vmatpush1.msra.mxu0 0.0
    %1754 = vmatprep.subr.mxu0 0.0
    %1755 = vmatpush1.msra.mxu0 0.0
    %1756 = vmatprep.subr.mxu0 0.0
    %1757 = vmatpush1.msra.mxu0 0.0
    %1758 = vmatprep.subr.mxu0 0.0
    %1759 = vmatpush1.msra.mxu0 0.0
    %1760 = vmatprep.subr.mxu0 0.0
    %1761 = vmatpush1.msra.mxu0 0.0
    %1762 = vmatprep.subr.mxu0 0.0
    %1763 = vmatpush1.msra.mxu0 0.0
    %1764 = vmatprep.subr.mxu0 0.0
    %1765 = vmatpush1.msra.mxu0 0.0
    %1766 = vmatprep.subr.mxu0 0.0
    %1767 = vmatpush1.msra.mxu0 0.0
    %1768 = vmatprep.subr.mxu0 0.0
    %1769 = vmatpush1.msra.mxu0 0.0
    %1770 = vmatprep.subr.mxu0 0.0
    %1771 = vmatpush1.msra.mxu0 0.0
    %1772 = vmatprep.subr.mxu0 0.0
    %1773 = vmatpush1.msra.mxu0 0.0
    %1774 = vmatprep.mubr.f32.mxu0 0.0
    %1775 = vmatmul.mubr.f32.gmra.mrb[0].mxu0 %v1708
    %v1776 = vpop.f32.mrb[0].mxu0
    %v1777 = vadd.f32 0.0, %v1776
    %v1778 = vpop.f32.mrb[0].mxu0
    %1779 = vdwg.mxu0
    %1782 = vrot.lane.b32.xlu0 %v1701, 24
    %v1783 = vpop.permute.xlu0 %1782
    %1784 = vrot.lane.b32.xlu0 %v1777, 24
    %v1785 = vpop.permute.xlu0 %1784
    %vm1788 = vcmask 261312
    %1789 = vst.msk [vmem:[#allocation2] sm:$0xff] %vm1788, %v1783
    %1790 = vst.msk [vmem:[#allocation2 + $0x8] sm:$0xff] %vm1788, %v1785
    %v1791 = vld [vmem:[#allocation2] sm:$0xff]
    %v1792 = vld [vmem:[#allocation2 + $0x8] sm:$0xff]
    %v1793 = vld [vmem:[%s6] sm:$0xff]
    %v1794 = vld [vmem:[%s6 + $0x8] sm:$0xff]
    %v1795 = vld [vmem:[%s6 + $0x10] sm:$0xff]
    %v1796 = vld [vmem:[%s6 + $0x18] sm:$0xff]
    %v1797 = vld [vmem:[#allocation6] sm:$0x1]
    %v1799 = vlaneseq
    %v1800 = vshrl.u32 %v1799, 7
    %v1801 = vsub.s32 0, %v1800
    %v1802 = vrot.slane %v1797, %v1801
    %v1805 = vsel %vm109, %v1791, 0
    %v1808 = vsel %vm109, %v1792, 0
    %1810 = vmatprep.subr.mxu0 0.0
    %1811 = vmatpush1.msra.mxu0 %v1793
    %1812 = vmatprep.subr.mxu0 0.0
    %1813 = vmatpush1.msra.mxu0 %v1794
    %1814 = vmatprep.subr.mxu0 0.0
    %1815 = vmatpush1.msra.mxu0 %v1795
    %1816 = vmatprep.subr.mxu0 0.0
    %1817 = vmatpush1.msra.mxu0 %v1796
    %1818 = vmatprep.subr.mxu0 0.0
    %1819 = vmatpush1.msra.mxu0 0.0
    %1820 = vmatprep.subr.mxu0 0.0
    %1821 = vmatpush1.msra.mxu0 0.0
    %1822 = vmatprep.subr.mxu0 0.0
    %1823 = vmatpush1.msra.mxu0 0.0
    %1824 = vmatprep.subr.mxu0 0.0
    %1825 = vmatpush1.msra.mxu0 0.0
    %1826 = vmatprep.subr.mxu0 0.0
    %1827 = vmatpush1.msra.mxu0 0.0
    %1828 = vmatprep.subr.mxu0 0.0
    %1829 = vmatpush1.msra.mxu0 0.0
    %1830 = vmatprep.subr.mxu0 0.0
    %1831 = vmatpush1.msra.mxu0 0.0
    %1832 = vmatprep.subr.mxu0 0.0
    %1833 = vmatpush1.msra.mxu0 0.0
    %1834 = vmatprep.subr.mxu0 0.0
    %1835 = vmatpush1.msra.mxu0 0.0
    %1836 = vmatprep.subr.mxu0 0.0
    %1837 = vmatpush1.msra.mxu0 0.0
    %1838 = vmatprep.subr.mxu0 0.0
    %1839 = vmatpush1.msra.mxu0 0.0
    %1840 = vmatprep.subr.mxu0 0.0
    %1841 = vmatpush1.msra.mxu0 0.0
    %1842 = vmatprep.subr.mxu0 0.0
    %1843 = vmatpush1.msra.mxu0 0.0
    %1844 = vmatprep.subr.mxu0 0.0
    %1845 = vmatpush1.msra.mxu0 0.0
    %1846 = vmatprep.subr.mxu0 0.0
    %1847 = vmatpush1.msra.mxu0 0.0
    %1848 = vmatprep.subr.mxu0 0.0
    %1849 = vmatpush1.msra.mxu0 0.0
    %1850 = vmatprep.subr.mxu0 0.0
    %1851 = vmatpush1.msra.mxu0 0.0
    %1852 = vmatprep.subr.mxu0 0.0
    %1853 = vmatpush1.msra.mxu0 0.0
    %1854 = vmatprep.subr.mxu0 0.0
    %1855 = vmatpush1.msra.mxu0 0.0
    %1856 = vmatprep.subr.mxu0 0.0
    %1857 = vmatpush1.msra.mxu0 0.0
    %1858 = vmatprep.subr.mxu0 0.0
    %1859 = vmatpush1.msra.mxu0 0.0
    %1860 = vmatprep.subr.mxu0 0.0
    %1861 = vmatpush1.msra.mxu0 0.0
    %1862 = vmatprep.subr.mxu0 0.0
    %1863 = vmatpush1.msra.mxu0 0.0
    %1864 = vmatprep.subr.mxu0 0.0
    %1865 = vmatpush1.msra.mxu0 0.0
    %1866 = vmatprep.subr.mxu0 0.0
    %1867 = vmatpush1.msra.mxu0 0.0
    %1868 = vmatprep.subr.mxu0 0.0
    %1869 = vmatpush1.msra.mxu0 0.0
    %1870 = vmatprep.subr.mxu0 0.0
    %1871 = vmatpush1.msra.mxu0 0.0
    %1872 = vmatprep.subr.mxu0 0.0
    %1873 = vmatpush1.msra.mxu0 0.0
    %1874 = vmatprep.mubr.f32.mxu0 0.0
    %1875 = vmatmul.mubr.f32.gmra.mrb[0].mxu0 %v1805
    %v1876 = vpop.f32.mrb[0].mxu0
    %v1877 = vadd.f32 %v1802, %v1876
    %v1878 = vpop.f32.mrb[0].mxu0
    %1879 = vmatprep.mubr.f32.mxu0 0.0
    %1880 = vmatmul.mubr.f32.gmra.mrb[0].mxu0 %v1808
    %v1881 = vpop.f32.mrb[0].mxu0
    %v1882 = vadd.f32 %v1802, %v1881
    %v1883 = vpop.f32.mrb[0].mxu0
    %1884 = vdwg.mxu0
    %1887 = vrot.lane.b32.xlu0 %v1877, 64
    %v1888 = vpop.permute.xlu0 %1887
    %1889 = vrot.lane.b32.xlu0 %v1882, 64
    %v1890 = vpop.permute.xlu0 %1889
    %v1893 = vmul.f32 %v328, %v1888
    %v1894 = vmul.f32 %v332, %v1890
    %1897 = vrot.lane.b32.xlu0 %v1893, 64
    %v1898 = vpop.permute.xlu0 %1897
    %1899 = vrot.lane.b32.xlu0 %v1894, 64
    %v1900 = vpop.permute.xlu0 %1899
    %v1903 = vadd.f32 %v79, %v1898
    %v1904 = vadd.f32 %v80, %v1900
    %v1905 = vsel %vm109, %v1903, 0.0
    %1906 = vadd.xlane.f32.xlu0 %v1905
    %v1907 = vpop.xlane.xlu0 %1906
    %v1908 = vsel %vm109, %v1904, 0.0
    %1909 = vadd.xlane.f32.xlu0 %v1908
    %v1910 = vpop.xlane.xlu0 %1909
    %v1911 = vmul.f32 %v1907, %v284
    %v1912 = vmul.f32 %v1910, %v284
    %v1913 = vmul.f32 %v1903, %v1903
    %v1914 = vmul.f32 %v1904, %v1904
    %v1915 = vsel %vm109, %v1913, 0.0
    %1916 = vadd.xlane.f32.xlu0 %v1915
    %v1917 = vpop.xlane.xlu0 %1916
    %v1918 = vsel %vm109, %v1914, 0.0
    %1919 = vadd.xlane.f32.xlu0 %v1918
    %v1920 = vpop.xlane.xlu0 %1919
    %v1921 = vmul.f32 %v1917, %v284
    %v1922 = vmul.f32 %v1920, %v284
    %v1923 = vmul.f32 %v1911, %v1911
    %v1924 = vmul.f32 %v1912, %v1912
    %v1925 = vsub.f32 %v1921, %v1923
    %v1926 = vsub.f32 %v1922, %v1924
    %v1927 = vsub.f32 %v1903, %v1911
    %v1928 = vsub.f32 %v1904, %v1912
    %v1929 = vadd.f32 %v1925, 1e-06
    %v1930 = vadd.f32 %v1926, 1e-06
    %v1931 = vrsqrt.pop %v1929
    %v1932 = vrsqrt.pop %v1930
    %v1933 = vmul.f32 %v1927, %v1931
    %v1934 = vmul.f32 %v1928, %v1932
    %v1935 = vlaneseq
    %v1936 = vshrl.u32 %v1935, 7
    %v1937 = vsub.s32 0, %v1936
    %v1938 = vrot.slane %v247, %v1937
    %v1939 = vlaneseq
    %v1940 = vshrl.u32 %v1939, 7
    %v1941 = vsub.s32 0, %v1940
    %v1942 = vrot.slane %v254, %v1941
    %v1945 = vmul.f32 %v1933, %v1938
    %v1946 = vmul.f32 %v1934, %v1942
    %1947 = vrot.lane.b32.xlu0 %v328, 32
    %v1948 = vpop.permute.xlu0 %1947
    %1949 = vrot.lane.b32.xlu0 %v332, 32
    %v1950 = vpop.permute.xlu0 %1949
    %v1953 = vadd.f32 %v1945, %v1948
    %v1954 = vadd.f32 %v1946, %v1950
    %v1955 = vld [vmem:[%s8] sm:$0xff]
    %v1956 = vld [vmem:[%s8 + $0x8] sm:$0xff]
    %v1957 = vld [vmem:[%s8 + $0x10] sm:$0xff]
    %v1958 = vld [vmem:[%s8 + $0x18] sm:$0xff]
    %v1959 = vld [vmem:[#allocation8] sm:$0x1]
    %v1961 = vlaneseq
    %v1962 = vshrl.u32 %v1961, 7
    %v1963 = vsub.s32 0, %v1962
    %v1964 = vrot.slane %v1959, %v1963
    %v1967 = vsel %vm109, %v1953, 0
    %v1970 = vsel %vm109, %v1954, 0
    %1972 = vmatprep.subr.mxu0 0.0
    %1973 = vmatpush1.msra.mxu0 %v1955
    %1974 = vmatprep.subr.mxu0 0.0
    %1975 = vmatpush1.msra.mxu0 %v1956
    %1976 = vmatprep.subr.mxu0 0.0
    %1977 = vmatpush1.msra.mxu0 %v1957
    %1978 = vmatprep.subr.mxu0 0.0
    %1979 = vmatpush1.msra.mxu0 %v1958
    %1980 = vmatprep.subr.mxu0 0.0
    %1981 = vmatpush1.msra.mxu0 0.0
    %1982 = vmatprep.subr.mxu0 0.0
    %1983 = vmatpush1.msra.mxu0 0.0
    %1984 = vmatprep.subr.mxu0 0.0
    %1985 = vmatpush1.msra.mxu0 0.0
    %1986 = vmatprep.subr.mxu0 0.0
    %1987 = vmatpush1.msra.mxu0 0.0
    %1988 = vmatprep.subr.mxu0 0.0
    %1989 = vmatpush1.msra.mxu0 0.0
    %1990 = vmatprep.subr.mxu0 0.0
    %1991 = vmatpush1.msra.mxu0 0.0
    %1992 = vmatprep.subr.mxu0 0.0
    %1993 = vmatpush1.msra.mxu0 0.0
    %1994 = vmatprep.subr.mxu0 0.0
    %1995 = vmatpush1.msra.mxu0 0.0
    %1996 = vmatprep.subr.mxu0 0.0
    %1997 = vmatpush1.msra.mxu0 0.0
    %1998 = vmatprep.subr.mxu0 0.0
    %1999 = vmatpush1.msra.mxu0 0.0
    %2000 = vmatprep.subr.mxu0 0.0
    %2001 = vmatpush1.msra.mxu0 0.0
    %2002 = vmatprep.subr.mxu0 0.0
    %2003 = vmatpush1.msra.mxu0 0.0
    %2004 = vmatprep.subr.mxu0 0.0
    %2005 = vmatpush1.msra.mxu0 0.0
    %2006 = vmatprep.subr.mxu0 0.0
    %2007 = vmatpush1.msra.mxu0 0.0
    %2008 = vmatprep.subr.mxu0 0.0
    %2009 = vmatpush1.msra.mxu0 0.0
    %2010 = vmatprep.subr.mxu0 0.0
    %2011 = vmatpush1.msra.mxu0 0.0
    %2012 = vmatprep.subr.mxu0 0.0
    %2013 = vmatpush1.msra.mxu0 0.0
    %2014 = vmatprep.subr.mxu0 0.0
    %2015 = vmatpush1.msra.mxu0 0.0
    %2016 = vmatprep.subr.mxu0 0.0
    %2017 = vmatpush1.msra.mxu0 0.0
    %2018 = vmatprep.subr.mxu0 0.0
    %2019 = vmatpush1.msra.mxu0 0.0
    %2020 = vmatprep.subr.mxu0 0.0
    %2021 = vmatpush1.msra.mxu0 0.0
    %2022 = vmatprep.subr.mxu0 0.0
    %2023 = vmatpush1.msra.mxu0 0.0
    %2024 = vmatprep.subr.mxu0 0.0
    %2025 = vmatpush1.msra.mxu0 0.0
    %2026 = vmatprep.subr.mxu0 0.0
    %2027 = vmatpush1.msra.mxu0 0.0
    %2028 = vmatprep.subr.mxu0 0.0
    %2029 = vmatpush1.msra.mxu0 0.0
    %2030 = vmatprep.subr.mxu0 0.0
    %2031 = vmatpush1.msra.mxu0 0.0
    %2032 = vmatprep.subr.mxu0 0.0
    %2033 = vmatpush1.msra.mxu0 0.0
    %2034 = vmatprep.subr.mxu0 0.0
    %2035 = vmatpush1.msra.mxu0 0.0
    %2036 = vmatprep.mubr.f32.mxu0 0.0
    %2037 = vmatmul.mubr.f32.gmra.mrb[0].mxu0 %v1967
    %v2038 = vpop.f32.mrb[0].mxu0
    %v2039 = vadd.f32 %v1964, %v2038
    %v2040 = vpop.f32.mrb[0].mxu0
    %2041 = vmatprep.mubr.f32.mxu0 0.0
    %2042 = vmatmul.mubr.f32.gmra.mrb[0].mxu0 %v1970
    %v2043 = vpop.f32.mrb[0].mxu0
    %v2044 = vadd.f32 %v1964, %v2043
    %v2045 = vpop.f32.mrb[0].mxu0
    %2046 = vdwg.mxu0
    %v2047 = vmul.f32 %v2039, 0.5
    %v2048 = vmul.f32 %v2044, 0.5
    %v2049 = vmul.f32 %v2039, 0.044715
    %v2050 = vmul.f32 %v2044, 0.044715
    %v2051 = vmul.f32 %v2049, %v2039
    %v2052 = vmul.f32 %v2050, %v2044
    %v2053 = vmul.f32 %v2051, %v2039
    %v2054 = vmul.f32 %v2052, %v2044
    %v2055 = vadd.f32 %v2039, %v2053
    %v2056 = vadd.f32 %v2044, %v2054
    %v2057 = vmul.f32 %v2055, 0.7978846
    %v2058 = vmul.f32 %v2056, 0.7978846
    %v2059 = vtanh.pop %v2057
    %v2060 = vtanh.pop %v2058
    %v2061 = vadd.f32 %v2059, 1.0
    %v2062 = vadd.f32 %v2060, 1.0
    %v2063 = vmul.f32 %v2047, %v2061
    %v2064 = vmul.f32 %v2048, %v2062
    %v2065 = vld [vmem:[%s10] sm:$0xff]
    %v2066 = vld [vmem:[%s10 + $0x8] sm:$0xff]
    %v2067 = vld [vmem:[%s10 + $0x10] sm:$0xff]
    %v2068 = vld [vmem:[%s10 + $0x18] sm:$0xff]
    %v2069 = vld [vmem:[%s10 + $0x20] sm:$0xff]
    %v2070 = vld [vmem:[%s10 + $0x28] sm:$0xff]
    %v2071 = vld [vmem:[%s10 + $0x30] sm:$0xff]
    %v2072 = vld [vmem:[%s10 + $0x38] sm:$0xff]
    %v2073 = vld [vmem:[%s10 + $0x40] sm:$0xff]
    %v2074 = vld [vmem:[%s10 + $0x48] sm:$0xff]
    %v2075 = vld [vmem:[%s10 + $0x50] sm:$0xff]
    %v2076 = vld [vmem:[%s10 + $0x58] sm:$0xff]
    %v2077 = vld [vmem:[%s10 + $0x60] sm:$0xff]
    %v2078 = vld [vmem:[%s10 + $0x68] sm:$0xff]
    %v2079 = vld [vmem:[%s10 + $0x70] sm:$0xff]
    %v2080 = vld [vmem:[%s10 + $0x78] sm:$0xff]
    %v2081 = vld [vmem:[%s11] sm:$0x1]
    %v2083 = vlaneseq
    %v2084 = vshrl.u32 %v2083, 7
    %v2085 = vsub.s32 0, %v2084
    %v2086 = vrot.slane %v2081, %v2085
    %2088 = vmatprep.subr.mxu0 0.0
    %2089 = vmatpush1.msra.mxu0 %v2065
    %2090 = vmatprep.subr.mxu0 0.0
    %2091 = vmatpush1.msra.mxu0 %v2066
    %2092 = vmatprep.subr.mxu0 0.0
    %2093 = vmatpush1.msra.mxu0 %v2067
    %2094 = vmatprep.subr.mxu0 0.0
    %2095 = vmatpush1.msra.mxu0 %v2068
    %2096 = vmatprep.subr.mxu0 0.0
    %2097 = vmatpush1.msra.mxu0 %v2069
    %2098 = vmatprep.subr.mxu0 0.0
    %2099 = vmatpush1.msra.mxu0 %v2070
    %2100 = vmatprep.subr.mxu0 0.0
    %2101 = vmatpush1.msra.mxu0 %v2071
    %2102 = vmatprep.subr.mxu0 0.0
    %2103 = vmatpush1.msra.mxu0 %v2072
    %2104 = vmatprep.subr.mxu0 0.0
    %2105 = vmatpush1.msra.mxu0 %v2073
    %2106 = vmatprep.subr.mxu0 0.0
    %2107 = vmatpush1.msra.mxu0 %v2074
    %2108 = vmatprep.subr.mxu0 0.0
    %2109 = vmatpush1.msra.mxu0 %v2075
    %2110 = vmatprep.subr.mxu0 0.0
    %2111 = vmatpush1.msra.mxu0 %v2076
    %2112 = vmatprep.subr.mxu0 0.0
    %2113 = vmatpush1.msra.mxu0 %v2077
    %2114 = vmatprep.subr.mxu0 0.0
    %2115 = vmatpush1.msra.mxu0 %v2078
    %2116 = vmatprep.subr.mxu0 0.0
    %2117 = vmatpush1.msra.mxu0 %v2079
    %2118 = vmatprep.subr.mxu0 0.0
    %2119 = vmatpush1.msra.mxu0 %v2080
    %2120 = vmatprep.subr.mxu0 0.0
    %2121 = vmatpush1.msra.mxu0 0.0
    %2122 = vmatprep.subr.mxu0 0.0
    %2123 = vmatpush1.msra.mxu0 0.0
    %2124 = vmatprep.subr.mxu0 0.0
    %2125 = vmatpush1.msra.mxu0 0.0
    %2126 = vmatprep.subr.mxu0 0.0
    %2127 = vmatpush1.msra.mxu0 0.0
    %2128 = vmatprep.subr.mxu0 0.0
    %2129 = vmatpush1.msra.mxu0 0.0
    %2130 = vmatprep.subr.mxu0 0.0
    %2131 = vmatpush1.msra.mxu0 0.0
    %2132 = vmatprep.subr.mxu0 0.0
    %2133 = vmatpush1.msra.mxu0 0.0
    %2134 = vmatprep.subr.mxu0 0.0
    %2135 = vmatpush1.msra.mxu0 0.0
    %2136 = vmatprep.subr.mxu0 0.0
    %2137 = vmatpush1.msra.mxu0 0.0
    %2138 = vmatprep.subr.mxu0 0.0
    %2139 = vmatpush1.msra.mxu0 0.0
    %2140 = vmatprep.subr.mxu0 0.0
    %2141 = vmatpush1.msra.mxu0 0.0
    %2142 = vmatprep.subr.mxu0 0.0
    %2143 = vmatpush1.msra.mxu0 0.0
    %2144 = vmatprep.subr.mxu0 0.0
    %2145 = vmatpush1.msra.mxu0 0.0
    %2146 = vmatprep.subr.mxu0 0.0
    %2147 = vmatpush1.msra.mxu0 0.0
    %2148 = vmatprep.subr.mxu0 0.0
    %2149 = vmatpush1.msra.mxu0 0.0
    %2150 = vmatprep.subr.mxu0 0.0
    %2151 = vmatpush1.msra.mxu0 0.0
    %2152 = vmatprep.mubr.f32.mxu0 0.0
    %2153 = vmatmul.mubr.f32.gmra.mrb[0].mxu0 %v2063
    %v2154 = vpop.f32.mrb[0].mxu0
    %v2155 = vadd.f32 %v2086, %v2154
    %v2156 = vpop.f32.mrb[0].mxu0
    %2157 = vmatprep.mubr.f32.mxu0 0.0
    %2158 = vmatmul.mubr.f32.gmra.mrb[0].mxu0 %v2064
    %v2159 = vpop.f32.mrb[0].mxu0
    %v2160 = vadd.f32 %v2086, %v2159
    %v2161 = vpop.f32.mrb[0].mxu0
    %2162 = vdwg.mxu0
    %v2163 = vlaneseq
    %v2164 = vshrl.u32 %v2163, 7
    %v2165 = vsub.s32 0, %v2164
    %v2166 = vrot.slane %v270, %v2165
    %v2167 = vlaneseq
    %v2168 = vshrl.u32 %v2167, 7
    %v2169 = vsub.s32 0, %v2168
    %v2170 = vrot.slane %v277, %v2169
    %2175 = vrot.lane.b32.xlu0 %v2155, 32
    %v2176 = vpop.permute.xlu0 %2175
    %2177 = vrot.lane.b32.xlu0 %v2160, 32
    %v2178 = vpop.permute.xlu0 %2177
    %v2181 = vmul.f32 %v2166, %v2176
    %v2182 = vmul.f32 %v2170, %v2178
    %2185 = vrot.lane.b32.xlu0 %v2181, 96
    %v2186 = vpop.permute.xlu0 %2185
    %2187 = vrot.lane.b32.xlu0 %v2182, 96
    %v2188 = vpop.permute.xlu0 %2187
    %v2191 = vadd.f32 %v1903, %v2186
    %v2192 = vadd.f32 %v1904, %v2188
    %2193 = vst.msk [vmem:[#allocation9] sm:$0xff] %vm109, %v2191
    %2194 = vst.msk [vmem:[#allocation9 + $0x8] sm:$0xff] %vm109, %v2192
    // Predicated region
    $region62: #{tpu_custom_call.1} parent=1 // pred_check
      _
    $region63: #{tpu_custom_call.1} parent=1 // pred_check_branch
      %2196 = sbr.rel (0) target = $region65
    $region64: #{tpu_custom_call.1} parent=1 // pred_region
      %s2198 = ssub.s32 256, 256
      %2199 = vsyncadd [#allocation5], %s2198
      %s2200 = sshll.u32 [#allocation9], 4
      %s2201 = int_to_ptr.vmem [resolvable:$true] %s2200
      %2206 = dma.vmem_to_hbm [thread:$0]  %s2201, 256, %s12, [#allocation5], 128, 128, 8
    $region65: #{tpu_custom_call.1} parent=1 // pred_fallthru
      _
    // Predicated region
    $region66: #{tpu_custom_call.1} parent=1 // pred_check
      _
    $region67: #{tpu_custom_call.1} parent=1 // pred_check_branch
      %2208 = sbr.rel (0) target = $region69
    $region68: #{tpu_custom_call.1} parent=1 // pred_region
      %2209 = dma.done [#allocation5], 256
    $region69: #{tpu_custom_call.1} parent=1 // pred_fallthru
      _
    %2210 = vsyncpa [#allocation4], 1
    %2211 = vsyncpa [#allocation7], 1
    %2212 = vsyncpa [#allocation5], 1

</llo_original>
